<compile_context>
chip_gen: v6e
topology: v6e:2x2x1
jax: 0.10.0
libtpu: 0.0.40
codegen_flags: <defaults>
</compile_context>

<pallas_src>
import jax
import jax.numpy as jnp
from jax import lax
from jax.experimental import pallas as pl
from jax.experimental.pallas import tpu as pltpu

EPS = 1e-6

# ---- config (small, consistent with the module) ------------------------------
GCN_NODE_DIM = 32            # cfg['gcn_node_dim']
NUM_GCN_LAYERS = 2           # cfg['num_gcn_layers']
NUM_EDGE_FC_LAYERS = 2       # cfg['num_edge_fc_layers'] (2 hardcoded in kernel)
STATE_ENC_HIDDEN = (32, 32)  # cfg['state_encoder_hidden_size']
NUMERICAL_FEATURE_SIZE = 16  # agent.numerical_feature_size
NODE_DIM = 8                 # agent.node_dim
MAX_NUM_NODES = 16           # cfg['max_num_nodes']
MAX_NUM_EDGES = 32           # cfg['max_num_edges']
PART_DIM = 5                 # per-edge "part" feature width (2*D + 5*2 input)
STAGE_DIM = 3
BATCH = 2

VALUE_SIZE = 2 * GCN_NODE_DIM + STATE_ENC_HIDDEN[-1] + STAGE_DIM   # 99
VALUE_PAD = 128                                                    # lane-dense output
STAGE_PAD = VALUE_PAD - (2 * GCN_NODE_DIM + STATE_ENC_HIDDEN[-1])  # 32


# ---------------------------- packed weight slab layout ------------------------
def _round8(n):
    return (n + 7) // 8 * 8


def _slab_layout():
    """Static row offsets of every parameter block inside the packed slab."""
    D = GCN_NODE_DIM
    layout = {}
    off = 0

    def add(name, rows):
        nonlocal off
        layout[name] = off
        off += _round8(rows)

    add("wn0", NUMERICAL_FEATURE_SIZE)   # (16, H0)   lanes [0:H0]
    add("wn1", STATE_ENC_HIDDEN[0])      # (H0, H1)   lanes [0:H1]
    add("wnd", NODE_DIM)                 # (nd, D)    lanes [0:D]
    add("bias", 3)                       # rows: bn0, bn1, bnd  (1, .) each
    add("wp", PART_DIM)                  # (5, 2D): layer0 lanes[0:D], layer1 [D:2D]
    add("b0", 1)                         # (1, 2D): lane-stacked fc0 biases
    add("b1", NUM_GCN_LAYERS)            # row l = fc1 bias of layer l, lanes [0:D]
    for l in range(NUM_GCN_LAYERS):
        add(f"w0ab{l}", D)               # (D, 2D) = [w0a | w0b]
        add(f"w1_{l}", D)                # (D, D)
    return layout, off


_SLAB_OFF, _SLAB_ROWS = _slab_layout()
_SLAB_LANES = 2 * GCN_NODE_DIM           # 64


# ---------------------------- fused Pallas kernel ------------------------------
def _sgnn_fused_kernel(w_ref, num_ref, nodes_ref, part_ref, idx_ref, stage_ref,
                       policy_ref, value_ref):
    f32 = jnp.float32
    D = GCN_NODE_DIM
    H0, H1 = STATE_ENC_HIDDEN
    F = NUMERICAL_FEATURE_SIZE
    ND = NODE_DIM
    L = NUM_GCN_LAYERS
    B = num_ref.shape[0]
    BN = nodes_ref.shape[0]              # B * max_num_nodes
    BE = part_ref.shape[0]               # B * max_num_edges
    N = BN // B
    E = BE // B
    o = _SLAB_OFF

    # ---- numerical feature encoder: Flatten -> (Linear -> Tanh) x 2 ----------
    wn0 = w_ref[o["wn0"]:o["wn0"] + F, 0:H0]
    wn1 = w_ref[o["wn1"]:o["wn1"] + H0, 0:H1]
    bn0 = w_ref[o["bias"]:o["bias"] + 1, 0:H0]
    bn1 = w_ref[o["bias"] + 1:o["bias"] + 2, 0:H1]
    h = jnp.tanh(jnp.dot(num_ref[...], wn0, preferred_element_type=f32) + bn0)
    h_num = jnp.tanh(jnp.dot(h, wn1, preferred_element_type=f32) + bn1)        # (B, H1)

    # ---- road node encoder over the whole flattened batch ---------------------
    wnd = w_ref[o["wnd"]:o["wnd"] + ND, 0:D]
    bnd = w_ref[o["bias"] + 2:o["bias"] + 3, 0:D]
    hn = jnp.dot(nodes_ref[...], wnd, preferred_element_type=f32) + bnd        # (BN, D)

    # ---- block-diagonal incidence, built ONCE from lane-major flat indices ----
    node_iota = lax.broadcasted_iota(jnp.int32, (BN, 2 * BE), 0)
    ohT = (node_iota == idx_ref[...]).astype(f32)        # (BN, 2BE): 1 iff idx[e]==n
    oh = jnp.transpose(ohT)                              # (2BE, BN): gather matrix
    ohT_sum = ohT[:, :BE] + ohT[:, BE:]                  # (BN, BE): scatter matrix
    # node degrees deg0+deg1 as a (BN, 1) column; layer-invariant (hoisted)
    inv_deg = 1.0 / (jnp.sum(ohT, axis=1, keepdims=True) + EPS)                # (BN, 1)

    # ---- loop-invariant part-feature contribution (both layers, lane-stacked) -
    wp = w_ref[o["wp"]:o["wp"] + PART_DIM, 0:2 * D]
    b0 = w_ref[o["b0"]:o["b0"] + 1, 0:2 * D]
    pb_all = jnp.dot(part_ref[...], wp, preferred_element_type=f32) + b0       # (BE, 2D)

    # ---- GCN layers: static unrolled loop, all weights resident in VMEM -------
    for l in range(L):
        r0 = o[f"w0ab{l}"]
        r1 = o[f"w1_{l}"]
        w0ab = w_ref[r0:r0 + D, 0:2 * D]                 # [w0a | w0b]
        w1 = w_ref[r1:r1 + D, 0:D]
        b1 = w_ref[o["b1"] + l:o["b1"] + l + 1, 0:D]
        pb = pb_all[:, l * D:(l + 1) * D]                # hoisted part term + bias

        # gather both endpoints with ONE stacked matmul: Hg = [h1; h2]
        Hg = jnp.dot(oh, hn, preferred_element_type=f32)                        # (2BE, D)
        # fused first edge-FC: one (2BE,D)x(D,2D) push for both weight blocks
        AB = jnp.dot(Hg, w0ab, preferred_element_type=f32)                      # (2BE, 2D)
        ab1 = AB[:BE]                                    # [h1@w0a | h1@w0b]
        ab2 = AB[BE:]                                    # [h2@w0a | h2@w0b]
        z12 = ab1[:, :D] + ab2[:, D:] + pb               # fc0([h1, p, h2, p]) pre-act
        z21 = ab2[:, :D] + ab1[:, D:] + pb               # fc0([h2, p, h1, p]) pre-act
        Z = jnp.tanh(jnp.concatenate([z12, z21], axis=0))                       # (2BE, D)
        # second edge-FC: single (2BE,D)x(D,D) matmul covers both orders
        Z = jnp.tanh(jnp.dot(Z, w1, preferred_element_type=f32) + b1)
        h_edges = 0.5 * (Z[:BE] + Z[BE:])                                       # (BE, D)

        # scatter-add to both endpoints with ONE matmul, mean by degree, residual
        ssum = jnp.dot(ohT_sum, h_edges, preferred_element_type=f32)            # (BN, D)
        hn = hn + ssum * inv_deg

    # ---- per-batch means: static sublane slices + sublane reductions (no MXU) -
    edges_mean = jnp.concatenate(
        [jnp.sum(h_edges[b * E:(b + 1) * E], axis=0, keepdims=True)
         for b in range(B)], axis=0) * (1.0 / E)                                # (B, D)
    nodes_mean = jnp.concatenate(
        [jnp.sum(hn[b * N:(b + 1) * N], axis=0, keepdims=True)
         for b in range(B)], axis=0) * (1.0 / N)                                # (B, D)

    # ---- outputs: [h_num | nodes_mean | edges_mean | stage(+pad)] -------------
    policy_ref[...] = h_edges                            # (B*E, D) contiguous slab
    value_ref[:, 0:H1] = h_num
    value_ref[:, H1:H1 + D] = nodes_mean
    value_ref[:, H1 + D:H1 + 2 * D] = edges_mean
    value_ref[:, H1 + 2 * D:VALUE_PAD] = stage_ref[...]  # stage zero-padded to 32


# ---------------------------- pallas_call wrapper -------------------------------
def _sgnn_pallas(wslab, num_x, nodes_x, part, idx, stage_p):
    B = num_x.shape[0]
    BE = part.shape[0]
    D = GCN_NODE_DIM
    vmem = pl.BlockSpec(memory_space=pltpu.MemorySpace.VMEM)
    return pl.pallas_call(
        _sgnn_fused_kernel,
        out_shape=(jax.ShapeDtypeStruct((BE, D), jnp.float32),
                   jax.ShapeDtypeStruct((B, VALUE_PAD), jnp.float32)),
        in_specs=[vmem] * 6,
        out_specs=(vmem, vmem),
    )(wslab, num_x, nodes_x, part, idx, stage_p)


# ---------------------------- parameter init ------------------------------------
def _linear_init(key, fan_in, fan_out):
    kw, kb = jax.random.split(key)
    bound = 1.0 / jnp.sqrt(jnp.float32(fan_in))
    w = jax.random.uniform(kw, (fan_in, fan_out), jnp.float32, -bound, bound)
    b = jax.random.uniform(kb, (1, fan_out), jnp.float32, -bound, bound)
    return w, b


def init_params(key):
    """Build the single packed (rows-of-8, 2D-lane) f32 weight slab."""
    D = GCN_NODE_DIM
    H0, H1 = STATE_ENC_HIDDEN
    keys = jax.random.split(key, 3 + NUM_GCN_LAYERS * NUM_EDGE_FC_LAYERS)
    o = _SLAB_OFF

    wn0, bn0 = _linear_init(keys[0], NUMERICAL_FEATURE_SIZE, H0)
    wn1, bn1 = _linear_init(keys[1], H0, H1)
    wnd, bnd = _linear_init(keys[2], NODE_DIM, D)

    slab = jnp.zeros((_SLAB_ROWS, _SLAB_LANES), jnp.float32)
    slab = slab.at[o["wn0"]:o["wn0"] + NUMERICAL_FEATURE_SIZE, 0:H0].set(wn0)
    slab = slab.at[o["wn1"]:o["wn1"] + H0, 0:H1].set(wn1)
    slab = slab.at[o["wnd"]:o["wnd"] + NODE_DIM, 0:D].set(wnd)
    slab = slab.at[o["bias"]:o["bias"] + 1, 0:H0].set(bn0)
    slab = slab.at[o["bias"] + 1:o["bias"] + 2, 0:H1].set(bn1)
    slab = slab.at[o["bias"] + 2:o["bias"] + 3, 0:D].set(bnd)

    ki = 3
    for l in range(NUM_GCN_LAYERS):
        # edge FC: Linear(2D+10 -> D) + Tanh, Linear(D -> D) + Tanh
        wf, bf = _linear_init(keys[ki], 2 * D + 2 * PART_DIM, D); ki += 1
        ws, bs = _linear_init(keys[ki], D, D); ki += 1
        # row blocks of the first weight: [node1 | part | node2 | part];
        # the two part blocks are pre-summed (p@Wp1 + p@Wp2 = p@(Wp1+Wp2)).
        w0a = wf[0:D]
        w0b = wf[D + PART_DIM:2 * D + PART_DIM]
        wp_l = wf[D:D + PART_DIM] + wf[2 * D + PART_DIM:2 * D + 2 * PART_DIM]
        r = o[f"w0ab{l}"]
        slab = slab.at[r:r + D, 0:D].set(w0a)
        slab = slab.at[r:r + D, D:2 * D].set(w0b)
        slab = slab.at[o["wp"]:o["wp"] + PART_DIM, l * D:(l + 1) * D].set(wp_l)
        slab = slab.at[o["b0"]:o["b0"] + 1, l * D:(l + 1) * D].set(bf)
        slab = slab.at[o["b1"] + l:o["b1"] + l + 1, 0:D].set(bs)
        r = o[f"w1_{l}"]
        slab = slab.at[r:r + D, 0:D].set(ws)
    return slab


# ---------------------------- forward --------------------------------------------
def _sgnn_forward_impl(wslab, numerical, node_feature, edge_part_feature,
                       edge_index, edge_mask, stage):
    B, N, nd = node_feature.shape
    E = edge_part_feature.shape[1]
    D = GCN_NODE_DIM

    num_x = numerical.reshape(B, -1).astype(jnp.float32)
    nodes_x = node_feature.reshape(B * N, nd).astype(jnp.float32)
    part = edge_part_feature.reshape(B * E, -1).astype(jnp.float32)
    stage_f = stage.astype(jnp.float32)
    stage_p = jnp.pad(stage_f, ((0, 0), (0, STAGE_PAD - stage_f.shape[1])))

    # Flat block-diagonal endpoint indices, LANE-major (1, 2*B*E) int32; the
    # one-hot incidence itself is built inside the kernel (iota + compare).
    base = (jnp.arange(B, dtype=jnp.int32) * N)[:, None]
    flat0 = (edge_index[..., 0].astype(jnp.int32) + base).reshape(-1)
    flat1 = (edge_index[..., 1].astype(jnp.int32) + base).reshape(-1)
    idx = jnp.concatenate([flat0, flat1], axis=0).reshape(1, 2 * B * E)

    policy_flat, value_pad = _sgnn_pallas(wslab, num_x, nodes_x, part, idx, stage_p)

    state_policy_road = policy_flat.reshape(B, E, D)     # free row-major reshape
    state_value = value_pad[:, :VALUE_SIZE]              # drop lane padding
    # edge_mask is not applied anywhere in the reference forward(); pass through.
    return state_policy_road, state_value, edge_mask, stage


sgnn_forward = jax.jit(_sgnn_forward_impl)


# ---------------------------- main ------------------------------------------------
if __name__ == "__main__":
    key = jax.random.PRNGKey(0)
    k_param, k_num, k_node, k_part, k_idx, k_stage = jax.random.split(key, 6)

    wslab = init_params(k_param)

    B, N, E = BATCH, MAX_NUM_NODES, MAX_NUM_EDGES
    numerical = jax.random.normal(k_num, (B, NUMERICAL_FEATURE_SIZE), jnp.float32)
    node_feature = jax.random.normal(k_node, (B, N, NODE_DIM), jnp.float32)
    edge_part_feature = jax.random.normal(k_part, (B, E, PART_DIM), jnp.float32)
    edge_index = jax.random.randint(k_idx, (B, E, 2), 0, N, jnp.int32)
    edge_mask = jnp.ones((B, E), dtype=jnp.bool_)
    stage = jax.random.normal(k_stage, (B, STAGE_DIM), jnp.float32)

    state_policy_road, state_value, edge_mask_out, stage_out = sgnn_forward(
        wslab, numerical, node_feature, edge_part_feature, edge_index,
        edge_mask, stage)
    jax.block_until_ready((state_policy_road, state_value,
                           edge_mask_out, stage_out))

    assert state_policy_road.shape == (B, E, GCN_NODE_DIM)
    assert state_value.shape == (B, VALUE_SIZE)
    assert bool(jnp.all(jnp.isfinite(state_policy_road)))
    assert bool(jnp.all(jnp.isfinite(state_value)))

    print("KERNEL_OK")
</pallas_src>

<mosaic_0001>
module attributes {stable_mosaic.version = 11 : i64} {
  func.func @_sgnn_fused_kernel(%arg0: memref<216x64xf32, #tpu.memory_space<vmem>>, %arg1: memref<2x16xf32, #tpu.memory_space<vmem>>, %arg2: memref<32x8xf32, #tpu.memory_space<vmem>>, %arg3: memref<64x5xf32, #tpu.memory_space<vmem>>, %arg4: memref<1x128xi32, #tpu.memory_space<vmem>>, %arg5: memref<2x32xf32, #tpu.memory_space<vmem>>, %arg6: memref<64x32xf32, #tpu.memory_space<vmem>>, %arg7: memref<2x128xf32, #tpu.memory_space<vmem>>) attributes {dimension_semantics = [], scalar_prefetch = 0 : i64, scratch_operands = 0 : i64, tpu.core_type = #tpu.core_type<tc>} {
    %c0 = arith.constant 0 : index
    %c0_0 = arith.constant 0 : index
    %0 = vector.load %arg0[%c0, %c0_0] : memref<216x64xf32, #tpu.memory_space<vmem>>, vector<16x32xf32>
    %c16 = arith.constant 16 : index
    %c0_1 = arith.constant 0 : index
    %1 = vector.load %arg0[%c16, %c0_1] : memref<216x64xf32, #tpu.memory_space<vmem>>, vector<32x32xf32>
    %c56 = arith.constant 56 : index
    %c0_2 = arith.constant 0 : index
    %2 = vector.load %arg0[%c56, %c0_2] : memref<216x64xf32, #tpu.memory_space<vmem>>, vector<1x32xf32>
    %c57 = arith.constant 57 : index
    %c0_3 = arith.constant 0 : index
    %3 = vector.load %arg0[%c57, %c0_3] : memref<216x64xf32, #tpu.memory_space<vmem>>, vector<1x32xf32>
    %c0_4 = arith.constant 0 : index
    %c0_5 = arith.constant 0 : index
    %4 = vector.load %arg1[%c0_4, %c0_5] : memref<2x16xf32, #tpu.memory_space<vmem>>, vector<2x16xf32>
    %cst = arith.constant dense<0.000000e+00> : vector<2x32xf32>
    %5 = tpu.matmul %4, %0, %cst {dimension_numbers = #tpu.dot_dimension_numbers<[1], [0], [0], [1], [0, 0, 1, 1], [], []>} : vector<2x16xf32>, vector<16x32xf32>, vector<2x32xf32> -> vector<2x32xf32>
    %6 = vector.broadcast %2 : vector<1x32xf32> to vector<2x32xf32>
    %7 = arith.addf %5, %6 : vector<2x32xf32>
    %8 = math.tanh %7 : vector<2x32xf32>
    %cst_6 = arith.constant dense<0.000000e+00> : vector<2x32xf32>
    %9 = tpu.matmul %8, %1, %cst_6 {dimension_numbers = #tpu.dot_dimension_numbers<[1], [0], [0], [1], [0, 0, 1, 1], [], []>} : vector<2x32xf32>, vector<32x32xf32>, vector<2x32xf32> -> vector<2x32xf32>
    %10 = vector.broadcast %3 : vector<1x32xf32> to vector<2x32xf32>
    %11 = arith.addf %9, %10 : vector<2x32xf32>
    %12 = math.tanh %11 : vector<2x32xf32>
    %c48 = arith.constant 48 : index
    %c0_7 = arith.constant 0 : index
    %13 = vector.load %arg0[%c48, %c0_7] : memref<216x64xf32, #tpu.memory_space<vmem>>, vector<8x32xf32>
    %c58 = arith.constant 58 : index
    %c0_8 = arith.constant 0 : index
    %14 = vector.load %arg0[%c58, %c0_8] : memref<216x64xf32, #tpu.memory_space<vmem>>, vector<1x32xf32>
    %c0_9 = arith.constant 0 : index
    %c0_10 = arith.constant 0 : index
    %15 = vector.load %arg2[%c0_9, %c0_10] : memref<32x8xf32, #tpu.memory_space<vmem>>, vector<32x8xf32>
    %cst_11 = arith.constant dense<0.000000e+00> : vector<32x32xf32>
    %16 = tpu.matmul %15, %13, %cst_11 {dimension_numbers = #tpu.dot_dimension_numbers<[1], [0], [0], [1], [0, 0, 1, 1], [], []>} : vector<32x8xf32>, vector<8x32xf32>, vector<32x32xf32> -> vector<32x32xf32>
    %17 = vector.broadcast %14 : vector<1x32xf32> to vector<32x32xf32>
    %18 = arith.addf %16, %17 : vector<32x32xf32>
    %19 = tpu.iota {dimensions = array<i32: 0>} : vector<32x128xi32>
    %c0_12 = arith.constant 0 : index
    %c0_13 = arith.constant 0 : index
    %20 = vector.load %arg4[%c0_12, %c0_13] : memref<1x128xi32, #tpu.memory_space<vmem>>, vector<1x128xi32>
    %21 = vector.broadcast %20 : vector<1x128xi32> to vector<32x128xi32>
    %22 = arith.cmpi eq, %19, %21 : vector<32x128xi32>
    %23 = arith.extui %22 : vector<32x128xi1> to vector<32x128xi32>
    %24 = arith.sitofp %23 : vector<32x128xi32> to vector<32x128xf32>
    %25 = tpu.transpose %24, [1, 0] : vector<32x128xf32> -> vector<128x32xf32>
    %26 = vector.extract_strided_slice %24 {offsets = [0, 0], sizes = [32, 64], strides = [1, 1]} : vector<32x128xf32> to vector<32x64xf32>
    %27 = vector.extract_strided_slice %24 {offsets = [0, 64], sizes = [32, 64], strides = [1, 1]} : vector<32x128xf32> to vector<32x64xf32>
    %28 = arith.addf %26, %27 : vector<32x64xf32>
    %cst_14 = arith.constant dense<0.000000e+00> : vector<32xf32>
    %29 = vector.multi_reduction <add>, %24, %cst_14 [1] : vector<32x128xf32> to vector<32xf32>
    %30 = vector.shape_cast %29 : vector<32xf32> to vector<32x1xf32>
    %cst_15 = arith.constant 9.99999997E-7 : f32
    %31 = vector.broadcast %cst_15 : f32 to vector<32x1xf32>
    %32 = arith.addf %30, %31 : vector<32x1xf32>
    %cst_16 = arith.constant 1.000000e+00 : f32
    %33 = vector.broadcast %cst_16 : f32 to vector<32x1xf32>
    %34 = arith.divf %33, %32 : vector<32x1xf32>
    %c64 = arith.constant 64 : index
    %c0_17 = arith.constant 0 : index
    %35 = vector.load %arg0[%c64, %c0_17] : memref<216x64xf32, #tpu.memory_space<vmem>>, vector<5x64xf32>
    %c72 = arith.constant 72 : index
    %c0_18 = arith.constant 0 : index
    %36 = vector.load %arg0[%c72, %c0_18] : memref<216x64xf32, #tpu.memory_space<vmem>>, vector<1x64xf32>
    %c0_19 = arith.constant 0 : index
    %c0_20 = arith.constant 0 : index
    %37 = vector.load %arg3[%c0_19, %c0_20] : memref<64x5xf32, #tpu.memory_space<vmem>>, vector<64x5xf32>
    %cst_21 = arith.constant dense<0.000000e+00> : vector<64x64xf32>
    %38 = tpu.matmul %37, %35, %cst_21 {dimension_numbers = #tpu.dot_dimension_numbers<[1], [0], [0], [1], [0, 0, 1, 1], [], []>} : vector<64x5xf32>, vector<5x64xf32>, vector<64x64xf32> -> vector<64x64xf32>
    %39 = vector.broadcast %36 : vector<1x64xf32> to vector<64x64xf32>
    %40 = arith.addf %38, %39 : vector<64x64xf32>
    %c88 = arith.constant 88 : index
    %c0_22 = arith.constant 0 : index
    %41 = vector.load %arg0[%c88, %c0_22] : memref<216x64xf32, #tpu.memory_space<vmem>>, vector<32x64xf32>
    %c120 = arith.constant 120 : index
    %c0_23 = arith.constant 0 : index
    %42 = vector.load %arg0[%c120, %c0_23] : memref<216x64xf32, #tpu.memory_space<vmem>>, vector<32x32xf32>
    %c80 = arith.constant 80 : index
    %c0_24 = arith.constant 0 : index
    %43 = vector.load %arg0[%c80, %c0_24] : memref<216x64xf32, #tpu.memory_space<vmem>>, vector<1x32xf32>
    %44 = vector.extract_strided_slice %40 {offsets = [0, 0], sizes = [64, 32], strides = [1, 1]} : vector<64x64xf32> to vector<64x32xf32>
    %cst_25 = arith.constant dense<0.000000e+00> : vector<128x32xf32>
    %45 = tpu.matmul %25, %18, %cst_25 {dimension_numbers = #tpu.dot_dimension_numbers<[1], [0], [0], [1], [0, 0, 1, 1], [], []>} : vector<128x32xf32>, vector<32x32xf32>, vector<128x32xf32> -> vector<128x32xf32>
    %cst_26 = arith.constant dense<0.000000e+00> : vector<128x64xf32>
    %46 = tpu.matmul %45, %41, %cst_26 {dimension_numbers = #tpu.dot_dimension_numbers<[1], [0], [0], [1], [0, 0, 1, 1], [], []>} : vector<128x32xf32>, vector<32x64xf32>, vector<128x64xf32> -> vector<128x64xf32>
    %47 = vector.extract_strided_slice %46 {offsets = [0, 0], sizes = [64, 64], strides = [1, 1]} : vector<128x64xf32> to vector<64x64xf32>
    %48 = vector.extract_strided_slice %46 {offsets = [64, 0], sizes = [64, 64], strides = [1, 1]} : vector<128x64xf32> to vector<64x64xf32>
    %49 = vector.extract_strided_slice %47 {offsets = [0, 0], sizes = [64, 32], strides = [1, 1]} : vector<64x64xf32> to vector<64x32xf32>
    %50 = vector.extract_strided_slice %48 {offsets = [0, 32], sizes = [64, 32], strides = [1, 1]} : vector<64x64xf32> to vector<64x32xf32>
    %51 = arith.addf %49, %50 : vector<64x32xf32>
    %52 = arith.addf %51, %44 : vector<64x32xf32>
    %53 = vector.extract_strided_slice %48 {offsets = [0, 0], sizes = [64, 32], strides = [1, 1]} : vector<64x64xf32> to vector<64x32xf32>
    %54 = vector.extract_strided_slice %47 {offsets = [0, 32], sizes = [64, 32], strides = [1, 1]} : vector<64x64xf32> to vector<64x32xf32>
    %55 = arith.addf %53, %54 : vector<64x32xf32>
    %56 = arith.addf %55, %44 : vector<64x32xf32>
    %57 = tpu.concatenate %52, %56 in 0 : vector<64x32xf32>, vector<64x32xf32> -> vector<128x32xf32>
    %58 = math.tanh %57 : vector<128x32xf32>
    %cst_27 = arith.constant dense<0.000000e+00> : vector<128x32xf32>
    %59 = tpu.matmul %58, %42, %cst_27 {dimension_numbers = #tpu.dot_dimension_numbers<[1], [0], [0], [1], [0, 0, 1, 1], [], []>} : vector<128x32xf32>, vector<32x32xf32>, vector<128x32xf32> -> vector<128x32xf32>
    %60 = vector.broadcast %43 : vector<1x32xf32> to vector<128x32xf32>
    %61 = arith.addf %59, %60 : vector<128x32xf32>
    %62 = math.tanh %61 : vector<128x32xf32>
    %63 = vector.extract_strided_slice %62 {offsets = [0, 0], sizes = [64, 32], strides = [1, 1]} : vector<128x32xf32> to vector<64x32xf32>
    %64 = vector.extract_strided_slice %62 {offsets = [64, 0], sizes = [64, 32], strides = [1, 1]} : vector<128x32xf32> to vector<64x32xf32>
    %65 = arith.addf %63, %64 : vector<64x32xf32>
    %cst_28 = arith.constant 5.000000e-01 : f32
    %66 = vector.broadcast %cst_28 : f32 to vector<64x32xf32>
    %67 = arith.mulf %66, %65 : vector<64x32xf32>
    %cst_29 = arith.constant dense<0.000000e+00> : vector<32x32xf32>
    %68 = tpu.matmul %28, %67, %cst_29 {dimension_numbers = #tpu.dot_dimension_numbers<[1], [0], [0], [1], [0, 0, 1, 1], [], []>} : vector<32x64xf32>, vector<64x32xf32>, vector<32x32xf32> -> vector<32x32xf32>
    %69 = vector.broadcast %34 : vector<32x1xf32> to vector<32x32xf32>
    %70 = arith.mulf %68, %69 : vector<32x32xf32>
    %71 = arith.addf %18, %70 : vector<32x32xf32>
    %c152 = arith.constant 152 : index
    %c0_30 = arith.constant 0 : index
    %72 = vector.load %arg0[%c152, %c0_30] : memref<216x64xf32, #tpu.memory_space<vmem>>, vector<32x64xf32>
    %c184 = arith.constant 184 : index
    %c0_31 = arith.constant 0 : index
    %73 = vector.load %arg0[%c184, %c0_31] : memref<216x64xf32, #tpu.memory_space<vmem>>, vector<32x32xf32>
    %c81 = arith.constant 81 : index
    %c0_32 = arith.constant 0 : index
    %74 = vector.load %arg0[%c81, %c0_32] : memref<216x64xf32, #tpu.memory_space<vmem>>, vector<1x32xf32>
    %75 = vector.extract_strided_slice %40 {offsets = [0, 32], sizes = [64, 32], strides = [1, 1]} : vector<64x64xf32> to vector<64x32xf32>
    %cst_33 = arith.constant dense<0.000000e+00> : vector<128x32xf32>
    %76 = tpu.matmul %25, %71, %cst_33 {dimension_numbers = #tpu.dot_dimension_numbers<[1], [0], [0], [1], [0, 0, 1, 1], [], []>} : vector<128x32xf32>, vector<32x32xf32>, vector<128x32xf32> -> vector<128x32xf32>
    %cst_34 = arith.constant dense<0.000000e+00> : vector<128x64xf32>
    %77 = tpu.matmul %76, %72, %cst_34 {dimension_numbers = #tpu.dot_dimension_numbers<[1], [0], [0], [1], [0, 0, 1, 1], [], []>} : vector<128x32xf32>, vector<32x64xf32>, vector<128x64xf32> -> vector<128x64xf32>
    %78 = vector.extract_strided_slice %77 {offsets = [0, 0], sizes = [64, 64], strides = [1, 1]} : vector<128x64xf32> to vector<64x64xf32>
    %79 = vector.extract_strided_slice %77 {offsets = [64, 0], sizes = [64, 64], strides = [1, 1]} : vector<128x64xf32> to vector<64x64xf32>
    %80 = vector.extract_strided_slice %78 {offsets = [0, 0], sizes = [64, 32], strides = [1, 1]} : vector<64x64xf32> to vector<64x32xf32>
    %81 = vector.extract_strided_slice %79 {offsets = [0, 32], sizes = [64, 32], strides = [1, 1]} : vector<64x64xf32> to vector<64x32xf32>
    %82 = arith.addf %80, %81 : vector<64x32xf32>
    %83 = arith.addf %82, %75 : vector<64x32xf32>
    %84 = vector.extract_strided_slice %79 {offsets = [0, 0], sizes = [64, 32], strides = [1, 1]} : vector<64x64xf32> to vector<64x32xf32>
    %85 = vector.extract_strided_slice %78 {offsets = [0, 32], sizes = [64, 32], strides = [1, 1]} : vector<64x64xf32> to vector<64x32xf32>
    %86 = arith.addf %84, %85 : vector<64x32xf32>
    %87 = arith.addf %86, %75 : vector<64x32xf32>
    %88 = tpu.concatenate %83, %87 in 0 : vector<64x32xf32>, vector<64x32xf32> -> vector<128x32xf32>
    %89 = math.tanh %88 : vector<128x32xf32>
    %cst_35 = arith.constant dense<0.000000e+00> : vector<128x32xf32>
    %90 = tpu.matmul %89, %73, %cst_35 {dimension_numbers = #tpu.dot_dimension_numbers<[1], [0], [0], [1], [0, 0, 1, 1], [], []>} : vector<128x32xf32>, vector<32x32xf32>, vector<128x32xf32> -> vector<128x32xf32>
    %91 = vector.broadcast %74 : vector<1x32xf32> to vector<128x32xf32>
    %92 = arith.addf %90, %91 : vector<128x32xf32>
    %93 = math.tanh %92 : vector<128x32xf32>
    %94 = vector.extract_strided_slice %93 {offsets = [0, 0], sizes = [64, 32], strides = [1, 1]} : vector<128x32xf32> to vector<64x32xf32>
    %95 = vector.extract_strided_slice %93 {offsets = [64, 0], sizes = [64, 32], strides = [1, 1]} : vector<128x32xf32> to vector<64x32xf32>
    %96 = arith.addf %94, %95 : vector<64x32xf32>
    %cst_36 = arith.constant 5.000000e-01 : f32
    %97 = vector.broadcast %cst_36 : f32 to vector<64x32xf32>
    %98 = arith.mulf %97, %96 : vector<64x32xf32>
    %cst_37 = arith.constant dense<0.000000e+00> : vector<32x32xf32>
    %99 = tpu.matmul %28, %98, %cst_37 {dimension_numbers = #tpu.dot_dimension_numbers<[1], [0], [0], [1], [0, 0, 1, 1], [], []>} : vector<32x64xf32>, vector<64x32xf32>, vector<32x32xf32> -> vector<32x32xf32>
    %100 = vector.broadcast %34 : vector<32x1xf32> to vector<32x32xf32>
    %101 = arith.mulf %99, %100 : vector<32x32xf32>
    %102 = arith.addf %71, %101 : vector<32x32xf32>
    %103 = vector.extract_strided_slice %98 {offsets = [0, 0], sizes = [32, 32], strides = [1, 1]} : vector<64x32xf32> to vector<32x32xf32>
    %cst_38 = arith.constant dense<0.000000e+00> : vector<32xf32>
    %104 = vector.multi_reduction <add>, %103, %cst_38 [0] : vector<32x32xf32> to vector<32xf32>
    %105 = vector.shape_cast %104 : vector<32xf32> to vector<1x32xf32>
    %106 = vector.extract_strided_slice %98 {offsets = [32, 0], sizes = [32, 32], strides = [1, 1]} : vector<64x32xf32> to vector<32x32xf32>
    %cst_39 = arith.constant dense<0.000000e+00> : vector<32xf32>
    %107 = vector.multi_reduction <add>, %106, %cst_39 [0] : vector<32x32xf32> to vector<32xf32>
    %108 = vector.shape_cast %107 : vector<32xf32> to vector<1x32xf32>
    %109 = tpu.concatenate %105, %108 in 0 : vector<1x32xf32>, vector<1x32xf32> -> vector<2x32xf32>
    %cst_40 = arith.constant 3.125000e-02 : f32
    %110 = vector.broadcast %cst_40 : f32 to vector<2x32xf32>
    %111 = arith.mulf %109, %110 : vector<2x32xf32>
    %112 = vector.extract_strided_slice %102 {offsets = [0, 0], sizes = [16, 32], strides = [1, 1]} : vector<32x32xf32> to vector<16x32xf32>
    %cst_41 = arith.constant dense<0.000000e+00> : vector<32xf32>
    %113 = vector.multi_reduction <add>, %112, %cst_41 [0] : vector<16x32xf32> to vector<32xf32>
    %114 = vector.shape_cast %113 : vector<32xf32> to vector<1x32xf32>
    %115 = vector.extract_strided_slice %102 {offsets = [16, 0], sizes = [16, 32], strides = [1, 1]} : vector<32x32xf32> to vector<16x32xf32>
    %cst_42 = arith.constant dense<0.000000e+00> : vector<32xf32>
    %116 = vector.multi_reduction <add>, %115, %cst_42 [0] : vector<16x32xf32> to vector<32xf32>
    %117 = vector.shape_cast %116 : vector<32xf32> to vector<1x32xf32>
    %118 = tpu.concatenate %114, %117 in 0 : vector<1x32xf32>, vector<1x32xf32> -> vector<2x32xf32>
    %cst_43 = arith.constant 6.250000e-02 : f32
    %119 = vector.broadcast %cst_43 : f32 to vector<2x32xf32>
    %120 = arith.mulf %118, %119 : vector<2x32xf32>
    %c0_44 = arith.constant 0 : index
    %c0_45 = arith.constant 0 : index
    %121 = vector.load %arg6[%c0_44, %c0_45] : memref<64x32xf32, #tpu.memory_space<vmem>>, vector<64x32xf32>
    tpu.vector_store %arg6[%c0_44, %c0_45], %98 {strides = array<i32>} : memref<64x32xf32, #tpu.memory_space<vmem>>, vector<64x32xf32>,
    %c0_46 = arith.constant 0 : index
    %c0_47 = arith.constant 0 : index
    %122 = vector.load %arg7[%c0_46, %c0_47] : memref<2x128xf32, #tpu.memory_space<vmem>>, vector<2x32xf32>
    tpu.vector_store %arg7[%c0_46, %c0_47], %12 {strides = array<i32>} : memref<2x128xf32, #tpu.memory_space<vmem>>, vector<2x32xf32>,
    %c0_48 = arith.constant 0 : index
    %c32 = arith.constant 32 : index
    %123 = vector.load %arg7[%c0_48, %c32] : memref<2x128xf32, #tpu.memory_space<vmem>>, vector<2x32xf32>
    tpu.vector_store %arg7[%c0_48, %c32], %120 {strides = array<i32>} : memref<2x128xf32, #tpu.memory_space<vmem>>, vector<2x32xf32>,
    %c0_49 = arith.constant 0 : index
    %c64_50 = arith.constant 64 : index
    %124 = vector.load %arg7[%c0_49, %c64_50] : memref<2x128xf32, #tpu.memory_space<vmem>>, vector<2x32xf32>
    tpu.vector_store %arg7[%c0_49, %c64_50], %111 {strides = array<i32>} : memref<2x128xf32, #tpu.memory_space<vmem>>, vector<2x32xf32>,
    %c0_51 = arith.constant 0 : index
    %c0_52 = arith.constant 0 : index
    %125 = vector.load %arg5[%c0_51, %c0_52] : memref<2x32xf32, #tpu.memory_space<vmem>>, vector<2x32xf32>
    %c0_53 = arith.constant 0 : index
    %c96 = arith.constant 96 : index
    %126 = vector.load %arg7[%c0_53, %c96] : memref<2x128xf32, #tpu.memory_space<vmem>>, vector<2x32xf32>
    tpu.vector_store %arg7[%c0_53, %c96], %125 {strides = array<i32>} : memref<2x128xf32, #tpu.memory_space<vmem>>, vector<2x32xf32>,
    return
  }
}

</mosaic_0001>

<llo_original>
// kernel: _sgnn_forward_impl.1
$region0: #{_sgnn_forward_impl.1}
  #allocation0 [shape = 'u32[]', space=smem, size = 0x4, offset = 0x4, fixed_abs, tag = 'smem constant byte address 0x4 - core index']
  #allocation1 [shape = 'u32[144,128]{1,0:T(1,128)}', space=vmem, size = 0x12000, scoped, tag = 'internal scratch']
  %s0 = inlined_call_operand.vmem [shape: f32[216,64], index: 0, kind: input, shape index: {}]
  %s1 = inlined_call_operand.vmem [shape: f32[2,16], index: 1, kind: input, shape index: {}]
  %s2 = inlined_call_operand.vmem [shape: f32[32,8], index: 2, kind: input, shape index: {}]
  %s3 = inlined_call_operand.vmem [shape: f32[64,5], index: 3, kind: input, shape index: {}]
  %s4 = inlined_call_operand.vmem [shape: s32[1,128], index: 4, kind: input, shape index: {}]
  %s5 = inlined_call_operand.vmem [shape: f32[2,32], index: 5, kind: input, shape index: {}]
  %s6 = inlined_call_operand.hbm [shape: f32[64,32], index: 6, kind: output, shape index: {0}]
  %s7 = inlined_call_operand.hbm [shape: f32[2,128], index: 7, kind: output, shape index: {1}]
  %8 = xla_tuple %s6, %s7
  %s9 = sld [smem:[#allocation0]]
  $region42: #{_sgnn_forward_impl.1} parent=0
    _
  %s11 = ssub.s32 1, %s9
  %s12 = scalar_select 0, %s11, %s9
  $region1: #{_sgnn_forward_impl.1} parent=0
    #allocation2 [shape = 'u8[32768]{0}', space=vmem, size = 0x8000, scoped, tag = 'output window, operand 0, single buffered']
    #allocation3 [shape = 's32[1]{0}', space=sflag, size = 0x4, scoped, tag = 'scoped memory for _sgnn_forward_impl.1']
    #allocation4 [shape = 'u8[1024]{0}', space=vmem, size = 0x400, scoped, tag = 'output window, operand 1, single buffered']
    #allocation5 [shape = 's32[1]{0}', space=sflag, size = 0x4, scoped, tag = 'scoped memory for _sgnn_forward_impl.1']
    %13 = vsyncpa [#allocation3], 0
    %14 = vsyncpa [#allocation5], 0
    // Predicated region
    $region2: #{_sgnn_forward_impl.1} parent=1 // pred_check
      _
    $region3: #{_sgnn_forward_impl.1} parent=1 // pred_check_branch
      %16 = sbr.rel (0) target = $region5
    $region4: #{_sgnn_forward_impl.1} parent=1 // pred_region
      _
    $region5: #{_sgnn_forward_impl.1} parent=1 // pred_fallthru
      _
    // Predicated region
    $region6: #{_sgnn_forward_impl.1} parent=1 // pred_check
      _
    $region7: #{_sgnn_forward_impl.1} parent=1 // pred_check_branch
      %18 = sbr.rel (0) target = $region9
    $region8: #{_sgnn_forward_impl.1} parent=1 // pred_region
      _
    $region9: #{_sgnn_forward_impl.1} parent=1 // pred_fallthru
      _
    // Predicated region
    $region10: #{_sgnn_forward_impl.1} parent=1 // pred_check
      _
    $region11: #{_sgnn_forward_impl.1} parent=1 // pred_check_branch
      %20 = sbr.rel (0) target = $region13
    $region12: #{_sgnn_forward_impl.1} parent=1 // pred_region
      _
    $region13: #{_sgnn_forward_impl.1} parent=1 // pred_fallthru
      _
    // Predicated region
    $region14: #{_sgnn_forward_impl.1} parent=1 // pred_check
      _
    $region15: #{_sgnn_forward_impl.1} parent=1 // pred_check_branch
      %22 = sbr.rel (0) target = $region17
    $region16: #{_sgnn_forward_impl.1} parent=1 // pred_region
      _
    $region17: #{_sgnn_forward_impl.1} parent=1 // pred_fallthru
      _
    // Predicated region
    $region18: #{_sgnn_forward_impl.1} parent=1 // pred_check
      _
    $region19: #{_sgnn_forward_impl.1} parent=1 // pred_check_branch
      %24 = sbr.rel (0) target = $region21
    $region20: #{_sgnn_forward_impl.1} parent=1 // pred_region
      _
    $region21: #{_sgnn_forward_impl.1} parent=1 // pred_fallthru
      _
    // Predicated region
    $region22: #{_sgnn_forward_impl.1} parent=1 // pred_check
      _
    $region23: #{_sgnn_forward_impl.1} parent=1 // pred_check_branch
      %26 = sbr.rel (0) target = $region25
    $region24: #{_sgnn_forward_impl.1} parent=1 // pred_region
      _
    $region25: #{_sgnn_forward_impl.1} parent=1 // pred_fallthru
      _
    %v27 = vld [vmem:[%s0] sm:$0xff]
    %v28 = vld [vmem:[%s0 + $0x8] sm:$0xff]
    %v29 = vld [vmem:[%s0 + $0x10] sm:$0xff]
    %v30 = vld [vmem:[%s0 + $0x18] sm:$0xff]
    %v31 = vld [vmem:[%s0 + $0x20] sm:$0xff]
    %v32 = vld [vmem:[%s0 + $0x28] sm:$0xff]
    %v33 = vld [vmem:[%s0 + $0x38] sm:$0x1]
    %v34 = vld [vmem:[%s0 + $0x39] sm:$0x1]
    %v35 = vld [vmem:[%s1] sm:$0x3]
    %v36 = vlaneseq
    %v37 = vshrl.u32 %v36, 7
    %v38 = vsub.s32 0, %v37
    %v39 = vrot.slane %v33, %v38
    %vm40 = vcmask 130048
    %v42 = vsel %vm40, %v35, 0
    %44 = vmatprep.subr.mxu0 0.0
    %45 = vmatpush1.msra.mxu0 0.0
    %46 = vmatprep.subr.mxu0 0.0
    %47 = vmatpush1.msra.mxu0 0.0
    %48 = vmatprep.subr.mxu0 0.0
    %49 = vmatpush1.msra.mxu0 0.0
    %50 = vmatprep.subr.mxu0 0.0
    %51 = vmatpush1.msra.mxu0 0.0
    %52 = vmatprep.subr.mxu0 0.0
    %53 = vmatpush1.msra.mxu0 0.0
    %54 = vmatprep.subr.mxu0 0.0
    %55 = vmatpush1.msra.mxu0 0.0
    %56 = vmatprep.subr.mxu0 0.0
    %57 = vmatpush1.msra.mxu0 0.0
    %58 = vmatprep.subr.mxu0 0.0
    %59 = vmatpush1.msra.mxu0 0.0
    %60 = vmatprep.subr.mxu0 0.0
    %61 = vmatpush1.msra.mxu0 0.0
    %62 = vmatprep.subr.mxu0 0.0
    %63 = vmatpush1.msra.mxu0 0.0
    %64 = vmatprep.subr.mxu0 0.0
    %65 = vmatpush1.msra.mxu0 0.0
    %66 = vmatprep.subr.mxu0 0.0
    %67 = vmatpush1.msra.mxu0 0.0
    %68 = vmatprep.subr.mxu0 0.0
    %69 = vmatpush1.msra.mxu0 0.0
    %70 = vmatprep.subr.mxu0 0.0
    %71 = vmatpush1.msra.mxu0 0.0
    %72 = vmatprep.subr.mxu0 0.0
    %73 = vmatpush1.msra.mxu0 %v28
    %74 = vmatprep.subr.mxu0 0.0
    %75 = vmatpush1.msra.mxu0 %v27
    %76 = vmatprep.subr.mxu0 0.0
    %77 = vmatpush2.msra.mxu0 0.0
    %78 = vmatprep.subr.mxu0 0.0
    %79 = vmatpush2.msra.mxu0 0.0
    %80 = vmatprep.subr.mxu0 0.0
    %81 = vmatpush2.msra.mxu0 0.0
    %82 = vmatprep.subr.mxu0 0.0
    %83 = vmatpush2.msra.mxu0 0.0
    %84 = vmatprep.subr.mxu0 0.0
    %85 = vmatpush2.msra.mxu0 0.0
    %86 = vmatprep.subr.mxu0 0.0
    %87 = vmatpush2.msra.mxu0 0.0
    %88 = vmatprep.subr.mxu0 0.0
    %89 = vmatpush2.msra.mxu0 0.0
    %90 = vmatprep.subr.mxu0 0.0
    %91 = vmatpush2.msra.mxu0 0.0
    %92 = vmatprep.subr.mxu0 0.0
    %93 = vmatpush2.msra.mxu0 0.0
    %94 = vmatprep.subr.mxu0 0.0
    %95 = vmatpush2.msra.mxu0 0.0
    %96 = vmatprep.subr.mxu0 0.0
    %97 = vmatpush2.msra.mxu0 0.0
    %98 = vmatprep.subr.mxu0 0.0
    %99 = vmatpush2.msra.mxu0 0.0
    %100 = vmatprep.subr.mxu0 0.0
    %101 = vmatpush2.msra.mxu0 0.0
    %102 = vmatprep.subr.mxu0 0.0
    %103 = vmatpush2.msra.mxu0 0.0
    %104 = vmatprep.subr.mxu0 0.0
    %105 = vmatpush2.msra.mxu0 0.0
    %106 = vmatprep.subr.mxu0 0.0
    %107 = vmatpush2.msra.mxu0 0.0
    %108 = vmatprep.mubr.f32.mxu0 0.0
    %109 = vmatmul.mubr.f32.gmra.mxu0 %v42
    %v110 = vpop.f32.mrf.mxu0
    %v111 = vadd.f32 %v39, %v110
    %v112 = vpop.f32.mrf.mxu0
    %113 = vdwg.mxu0
    %v114 = vtanh.pop %v111
    %v115 = vlaneseq
    %v116 = vshrl.u32 %v115, 7
    %v117 = vsub.s32 0, %v116
    %v118 = vrot.slane %v34, %v117
    %vm119 = vcmask 261120
    %v121 = vsel %vm119, %v114, 0
    %123 = vmatprep.subr.mxu0 0.0
    %124 = vmatpush1.msra.mxu0 0.0
    %125 = vmatprep.subr.mxu0 0.0
    %126 = vmatpush1.msra.mxu0 0.0
    %127 = vmatprep.subr.mxu0 0.0
    %128 = vmatpush1.msra.mxu0 0.0
    %129 = vmatprep.subr.mxu0 0.0
    %130 = vmatpush1.msra.mxu0 0.0
    %131 = vmatprep.subr.mxu0 0.0
    %132 = vmatpush1.msra.mxu0 0.0
    %133 = vmatprep.subr.mxu0 0.0
    %134 = vmatpush1.msra.mxu0 0.0
    %135 = vmatprep.subr.mxu0 0.0
    %136 = vmatpush1.msra.mxu0 0.0
    %137 = vmatprep.subr.mxu0 0.0
    %138 = vmatpush1.msra.mxu0 0.0
    %139 = vmatprep.subr.mxu0 0.0
    %140 = vmatpush1.msra.mxu0 0.0
    %141 = vmatprep.subr.mxu0 0.0
    %142 = vmatpush1.msra.mxu0 0.0
    %143 = vmatprep.subr.mxu0 0.0
    %144 = vmatpush1.msra.mxu0 0.0
    %145 = vmatprep.subr.mxu0 0.0
    %146 = vmatpush1.msra.mxu0 0.0
    %147 = vmatprep.subr.mxu0 0.0
    %148 = vmatpush1.msra.mxu0 %v32
    %149 = vmatprep.subr.mxu0 0.0
    %150 = vmatpush1.msra.mxu0 %v31
    %151 = vmatprep.subr.mxu0 0.0
    %152 = vmatpush1.msra.mxu0 %v30
    %153 = vmatprep.subr.mxu0 0.0
    %154 = vmatpush1.msra.mxu0 %v29
    %155 = vmatprep.subr.mxu0 0.0
    %156 = vmatpush2.msra.mxu0 0.0
    %157 = vmatprep.subr.mxu0 0.0
    %158 = vmatpush2.msra.mxu0 0.0
    %159 = vmatprep.subr.mxu0 0.0
    %160 = vmatpush2.msra.mxu0 0.0
    %161 = vmatprep.subr.mxu0 0.0
    %162 = vmatpush2.msra.mxu0 0.0
    %163 = vmatprep.subr.mxu0 0.0
    %164 = vmatpush2.msra.mxu0 0.0
    %165 = vmatprep.subr.mxu0 0.0
    %166 = vmatpush2.msra.mxu0 0.0
    %167 = vmatprep.subr.mxu0 0.0
    %168 = vmatpush2.msra.mxu0 0.0
    %169 = vmatprep.subr.mxu0 0.0
    %170 = vmatpush2.msra.mxu0 0.0
    %171 = vmatprep.subr.mxu0 0.0
    %172 = vmatpush2.msra.mxu0 0.0
    %173 = vmatprep.subr.mxu0 0.0
    %174 = vmatpush2.msra.mxu0 0.0
    %175 = vmatprep.subr.mxu0 0.0
    %176 = vmatpush2.msra.mxu0 0.0
    %177 = vmatprep.subr.mxu0 0.0
    %178 = vmatpush2.msra.mxu0 0.0
    %179 = vmatprep.subr.mxu0 0.0
    %180 = vmatpush2.msra.mxu0 0.0
    %181 = vmatprep.subr.mxu0 0.0
    %182 = vmatpush2.msra.mxu0 0.0
    %183 = vmatprep.subr.mxu0 0.0
    %184 = vmatpush2.msra.mxu0 0.0
    %185 = vmatprep.subr.mxu0 0.0
    %186 = vmatpush2.msra.mxu0 0.0
    %187 = vmatprep.mubr.f32.mxu0 0.0
    %188 = vmatmul.mubr.f32.gmra.mxu0 %v121
    %v189 = vpop.f32.mrf.mxu0
    %v190 = vadd.f32 %v118, %v189
    %v191 = vpop.f32.mrf.mxu0
    %192 = vdwg.mxu0
    %v193 = vtanh.pop %v190
    %v194 = vld [vmem:[%s0 + $0x30] sm:$0xff]
    %v195 = vld [vmem:[%s0 + $0x3a] sm:$0x1]
    %v196 = vld [vmem:[%s2] sm:$0xff]
    %v197 = vld [vmem:[%s2 + $0x8] sm:$0xff]
    %v198 = vld [vmem:[%s2 + $0x10] sm:$0xff]
    %v199 = vld [vmem:[%s2 + $0x18] sm:$0xff]
    %v200 = vlaneseq
    %v201 = vshrl.u32 %v200, 7
    %v202 = vsub.s32 0, %v201
    %v203 = vrot.slane %v195, %v202
    %vm204 = vcmask 64512
    %v206 = vsel %vm204, %v196, 0
    %v209 = vsel %vm204, %v197, 0
    %v212 = vsel %vm204, %v198, 0
    %v215 = vsel %vm204, %v199, 0
    %217 = vmatprep.subr.mxu0 0.0
    %218 = vmatpush1.msra.mxu0 0.0
    %219 = vmatprep.subr.mxu0 0.0
    %220 = vmatpush1.msra.mxu0 0.0
    %221 = vmatprep.subr.mxu0 0.0
    %222 = vmatpush1.msra.mxu0 0.0
    %223 = vmatprep.subr.mxu0 0.0
    %224 = vmatpush1.msra.mxu0 0.0
    %225 = vmatprep.subr.mxu0 0.0
    %226 = vmatpush1.msra.mxu0 0.0
    %227 = vmatprep.subr.mxu0 0.0
    %228 = vmatpush1.msra.mxu0 0.0
    %229 = vmatprep.subr.mxu0 0.0
    %230 = vmatpush1.msra.mxu0 0.0
    %231 = vmatprep.subr.mxu0 0.0
    %232 = vmatpush1.msra.mxu0 0.0
    %233 = vmatprep.subr.mxu0 0.0
    %234 = vmatpush1.msra.mxu0 0.0
    %235 = vmatprep.subr.mxu0 0.0
    %236 = vmatpush1.msra.mxu0 0.0
    %237 = vmatprep.subr.mxu0 0.0
    %238 = vmatpush1.msra.mxu0 0.0
    %239 = vmatprep.subr.mxu0 0.0
    %240 = vmatpush1.msra.mxu0 0.0
    %241 = vmatprep.subr.mxu0 0.0
    %242 = vmatpush1.msra.mxu0 0.0
    %243 = vmatprep.subr.mxu0 0.0
    %244 = vmatpush1.msra.mxu0 0.0
    %245 = vmatprep.subr.mxu0 0.0
    %246 = vmatpush1.msra.mxu0 0.0
    %247 = vmatprep.subr.mxu0 0.0
    %248 = vmatpush1.msra.mxu0 %v194
    %249 = vmatprep.subr.mxu0 0.0
    %250 = vmatpush2.msra.mxu0 0.0
    %251 = vmatprep.subr.mxu0 0.0
    %252 = vmatpush2.msra.mxu0 0.0
    %253 = vmatprep.subr.mxu0 0.0
    %254 = vmatpush2.msra.mxu0 0.0
    %255 = vmatprep.subr.mxu0 0.0
    %256 = vmatpush2.msra.mxu0 0.0
    %257 = vmatprep.subr.mxu0 0.0
    %258 = vmatpush2.msra.mxu0 0.0
    %259 = vmatprep.subr.mxu0 0.0
    %260 = vmatpush2.msra.mxu0 0.0
    %261 = vmatprep.subr.mxu0 0.0
    %262 = vmatpush2.msra.mxu0 0.0
    %263 = vmatprep.subr.mxu0 0.0
    %264 = vmatpush2.msra.mxu0 0.0
    %265 = vmatprep.subr.mxu0 0.0
    %266 = vmatpush2.msra.mxu0 0.0
    %267 = vmatprep.subr.mxu0 0.0
    %268 = vmatpush2.msra.mxu0 0.0
    %269 = vmatprep.subr.mxu0 0.0
    %270 = vmatpush2.msra.mxu0 0.0
    %271 = vmatprep.subr.mxu0 0.0
    %272 = vmatpush2.msra.mxu0 0.0
    %273 = vmatprep.subr.mxu0 0.0
    %274 = vmatpush2.msra.mxu0 0.0
    %275 = vmatprep.subr.mxu0 0.0
    %276 = vmatpush2.msra.mxu0 0.0
    %277 = vmatprep.subr.mxu0 0.0
    %278 = vmatpush2.msra.mxu0 0.0
    %279 = vmatprep.subr.mxu0 0.0
    %280 = vmatpush2.msra.mxu0 0.0
    %281 = vmatprep.mubr.f32.mxu0 0.0
    %282 = vmatmul.mubr.f32.gmra.mxu0 %v206
    %v283 = vpop.f32.mrf.mxu0
    %v284 = vadd.f32 %v203, %v283
    %v285 = vpop.f32.mrf.mxu0
    %286 = vmatprep.mubr.f32.mxu0 0.0
    %287 = vmatmul.mubr.f32.gmra.mxu0 %v209
    %v288 = vpop.f32.mrf.mxu0
    %v289 = vadd.f32 %v203, %v288
    %v290 = vpop.f32.mrf.mxu0
    %291 = vmatprep.mubr.f32.mxu0 0.0
    %292 = vmatmul.mubr.f32.gmra.mxu0 %v212
    %v293 = vpop.f32.mrf.mxu0
    %v294 = vadd.f32 %v203, %v293
    %v295 = vpop.f32.mrf.mxu0
    %296 = vmatprep.mubr.f32.mxu0 0.0
    %297 = vmatmul.mubr.f32.gmra.mxu0 %v215
    %v298 = vpop.f32.mrf.mxu0
    %v299 = vadd.f32 %v203, %v298
    %v300 = vpop.f32.mrf.mxu0
    %301 = vdwg.mxu0
    %v302 = vlaneseq
    %v303 = vshrl.u32 %v302, 7
    %v304 = vadd.s32 %v303, 8
    %v305 = vadd.s32 %v303, 16
    %v306 = vadd.s32 %v303, 24
    %v307 = vld [vmem:[%s4] sm:$0x1]
    %v308 = vlaneseq
    %v309 = vshrl.u32 %v308, 7
    %v310 = vsub.s32 0, %v309
    %v311 = vrot.slane %v307, %v310
    %vm312 = vcmp.eq.s32.totalorder %v303, %v311
    %vm313 = vcmp.eq.s32.totalorder %v304, %v311
    %vm314 = vcmp.eq.s32.totalorder %v305, %v311
    %vm315 = vcmp.eq.s32.totalorder %v306, %v311
    %v316 = vsel %vm312, 1, 0
    %v317 = vsel %vm313, 1, 0
    %v318 = vsel %vm314, 1, 0
    %v319 = vsel %vm315, 1, 0
    %v320 = vcvt.s32.f32 %v316
    %v321 = vcvt.s32.f32 %v317
    %v322 = vcvt.s32.f32 %v318
    %v323 = vcvt.s32.f32 %v319
    %324 = vxpose.xlu0.b32.start [1/16] %v320, 128
    %325 = vxpose.xlu0.b32.cont [2/16] %v321, 128
    %326 = vxpose.xlu0.b32.cont [3/16] %v322, 128
    %327 = vxpose.xlu0.b32.cont [4/16] %v323, 128
    %328 = vxpose.xlu0.b32.cont [5/16] 0.0, 128
    %329 = vxpose.xlu0.b32.cont [6/16] 0.0, 128
    %330 = vxpose.xlu0.b32.cont [7/16] 0.0, 128
    %331 = vxpose.xlu0.b32.cont [8/16] 0.0, 128
    %332 = vxpose.xlu0.b32.cont [9/16] 0.0, 128
    %333 = vxpose.xlu0.b32.cont [10/16] 0.0, 128
    %334 = vxpose.xlu0.b32.cont [11/16] 0.0, 128
    %335 = vxpose.xlu0.b32.cont [12/16] 0.0, 128
    %336 = vxpose.xlu0.b32.cont [13/16] 0.0, 128
    %337 = vxpose.xlu0.b32.cont [14/16] 0.0, 128
    %338 = vxpose.xlu0.b32.cont [15/16] 0.0, 128
    %339 = vxpose.xlu0.b32.end [16/16] 0.0, 128
    %v340 = vpop.trf.xlu0
    %v341 = vpop.trf.xlu0
    %v342 = vpop.trf.xlu0
    %v343 = vpop.trf.xlu0
    %v344 = vpop.trf.xlu0
    %v345 = vpop.trf.xlu0
    %v346 = vpop.trf.xlu0
    %v347 = vpop.trf.xlu0
    %v348 = vpop.trf.xlu0
    %v349 = vpop.trf.xlu0
    %v350 = vpop.trf.xlu0
    %v351 = vpop.trf.xlu0
    %v352 = vpop.trf.xlu0
    %v353 = vpop.trf.xlu0
    %v354 = vpop.trf.xlu0
    %v355 = vpop.trf.xlu0
    %360 = vrot.lane.b32.xlu0 %v320, 64
    %v361 = vpop.permute.xlu0 %360
    %362 = vrot.lane.b32.xlu0 %v321, 64
    %v363 = vpop.permute.xlu0 %362
    %364 = vrot.lane.b32.xlu0 %v322, 64
    %v365 = vpop.permute.xlu0 %364
    %366 = vrot.lane.b32.xlu0 %v323, 64
    %v367 = vpop.permute.xlu0 %366
    %v372 = vadd.f32 %v320, %v361
    %v373 = vadd.f32 %v321, %v363
    %v374 = vadd.f32 %v322, %v365
    %v375 = vadd.f32 %v323, %v367
    %376 = vadd.xlane.f32.xlu0 %v320
    %v377 = vpop.xlane.xlu0 %376
    %378 = vadd.xlane.f32.xlu0 %v321
    %v379 = vpop.xlane.xlu0 %378
    %380 = vadd.xlane.f32.xlu0 %v322
    %v381 = vpop.xlane.xlu0 %380
    %382 = vadd.xlane.f32.xlu0 %v323
    %v383 = vpop.xlane.xlu0 %382
    %v384 = vadd.f32 %v377, 1e-06
    %v385 = vadd.f32 %v379, 1e-06
    %v386 = vadd.f32 %v381, 1e-06
    %v387 = vadd.f32 %v383, 1e-06
    %v388 = vrcp.pop %v384
    %v389 = vmul.f32 1.0, %v388
    %v390 = vrcp.pop %v385
    %v391 = vmul.f32 1.0, %v390
    %v392 = vrcp.pop %v386
    %v393 = vmul.f32 1.0, %v392
    %v394 = vrcp.pop %v387
    %v395 = vmul.f32 1.0, %v394
    %v396 = vld [vmem:[%s0 + $0x40] sm:$0x1f]
    %v397 = vld [vmem:[%s0 + $0x48] sm:$0x1]
    %v398 = vld [vmem:[%s3] sm:$0xff]
    %v399 = vld [vmem:[%s3 + $0x8] sm:$0xff]
    %v400 = vld [vmem:[%s3 + $0x10] sm:$0xff]
    %v401 = vld [vmem:[%s3 + $0x18] sm:$0xff]
    %v402 = vld [vmem:[%s3 + $0x20] sm:$0xff]
    %v403 = vld [vmem:[%s3 + $0x28] sm:$0xff]
    %v404 = vld [vmem:[%s3 + $0x30] sm:$0xff]
    %v405 = vld [vmem:[%s3 + $0x38] sm:$0xff]
    %v406 = vlaneseq
    %v407 = vshrl.u32 %v406, 7
    %v408 = vsub.s32 0, %v407
    %v409 = vrot.slane %v397, %v408
    %vm410 = vcmask 39936
    %v412 = vsel %vm410, %v398, 0
    %v415 = vsel %vm410, %v399, 0
    %v418 = vsel %vm410, %v400, 0
    %v421 = vsel %vm410, %v401, 0
    %v424 = vsel %vm410, %v402, 0
    %v427 = vsel %vm410, %v403, 0
    %v430 = vsel %vm410, %v404, 0
    %v433 = vsel %vm410, %v405, 0
    %vm435 = vcmask 1044480
    %v437 = vsel %vm435, %v396, 0
    %439 = vmatprep.subr.mxu0 0.0
    %440 = vmatpush1.msra.mxu0 0.0
    %441 = vmatprep.subr.mxu0 0.0
    %442 = vmatpush1.msra.mxu0 0.0
    %443 = vmatprep.subr.mxu0 0.0
    %444 = vmatpush1.msra.mxu0 0.0
    %445 = vmatprep.subr.mxu0 0.0
    %446 = vmatpush1.msra.mxu0 0.0
    %447 = vmatprep.subr.mxu0 0.0
    %448 = vmatpush1.msra.mxu0 0.0
    %449 = vmatprep.subr.mxu0 0.0
    %450 = vmatpush1.msra.mxu0 0.0
    %451 = vmatprep.subr.mxu0 0.0
    %452 = vmatpush1.msra.mxu0 0.0
    %453 = vmatprep.subr.mxu0 0.0
    %454 = vmatpush1.msra.mxu0 0.0
    %455 = vmatprep.subr.mxu0 0.0
    %456 = vmatpush1.msra.mxu0 0.0
    %457 = vmatprep.subr.mxu0 0.0
    %458 = vmatpush1.msra.mxu0 0.0
    %459 = vmatprep.subr.mxu0 0.0
    %460 = vmatpush1.msra.mxu0 0.0
    %461 = vmatprep.subr.mxu0 0.0
    %462 = vmatpush1.msra.mxu0 0.0
    %463 = vmatprep.subr.mxu0 0.0
    %464 = vmatpush1.msra.mxu0 0.0
    %465 = vmatprep.subr.mxu0 0.0
    %466 = vmatpush1.msra.mxu0 0.0
    %467 = vmatprep.subr.mxu0 0.0
    %468 = vmatpush1.msra.mxu0 0.0
    %469 = vmatprep.subr.mxu0 0.0
    %470 = vmatpush1.msra.mxu0 %v437
    %471 = vmatprep.subr.mxu0 0.0
    %472 = vmatpush2.msra.mxu0 0.0
    %473 = vmatprep.subr.mxu0 0.0
    %474 = vmatpush2.msra.mxu0 0.0
    %475 = vmatprep.subr.mxu0 0.0
    %476 = vmatpush2.msra.mxu0 0.0
    %477 = vmatprep.subr.mxu0 0.0
    %478 = vmatpush2.msra.mxu0 0.0
    %479 = vmatprep.subr.mxu0 0.0
    %480 = vmatpush2.msra.mxu0 0.0
    %481 = vmatprep.subr.mxu0 0.0
    %482 = vmatpush2.msra.mxu0 0.0
    %483 = vmatprep.subr.mxu0 0.0
    %484 = vmatpush2.msra.mxu0 0.0
    %485 = vmatprep.subr.mxu0 0.0
    %486 = vmatpush2.msra.mxu0 0.0
    %487 = vmatprep.subr.mxu0 0.0
    %488 = vmatpush2.msra.mxu0 0.0
    %489 = vmatprep.subr.mxu0 0.0
    %490 = vmatpush2.msra.mxu0 0.0
    %491 = vmatprep.subr.mxu0 0.0
    %492 = vmatpush2.msra.mxu0 0.0
    %493 = vmatprep.subr.mxu0 0.0
    %494 = vmatpush2.msra.mxu0 0.0
    %495 = vmatprep.subr.mxu0 0.0
    %496 = vmatpush2.msra.mxu0 0.0
    %497 = vmatprep.subr.mxu0 0.0
    %498 = vmatpush2.msra.mxu0 0.0
    %499 = vmatprep.subr.mxu0 0.0
    %500 = vmatpush2.msra.mxu0 0.0
    %501 = vmatprep.subr.mxu0 0.0
    %502 = vmatpush2.msra.mxu0 0.0
    %503 = vmatprep.mubr.f32.mxu0 0.0
    %504 = vmatmul.mubr.f32.gmra.mxu0 %v412
    %v505 = vpop.f32.mrf.mxu0
    %v506 = vadd.f32 %v409, %v505
    %v507 = vpop.f32.mrf.mxu0
    %508 = vmatprep.mubr.f32.mxu0 0.0
    %509 = vmatmul.mubr.f32.gmra.mxu0 %v415
    %v510 = vpop.f32.mrf.mxu0
    %v511 = vadd.f32 %v409, %v510
    %v512 = vpop.f32.mrf.mxu0
    %513 = vmatprep.mubr.f32.mxu0 0.0
    %514 = vmatmul.mubr.f32.gmra.mxu0 %v418
    %v515 = vpop.f32.mrf.mxu0
    %v516 = vadd.f32 %v409, %v515
    %v517 = vpop.f32.mrf.mxu0
    %518 = vmatprep.mubr.f32.mxu0 0.0
    %519 = vmatmul.mubr.f32.gmra.mxu0 %v421
    %v520 = vpop.f32.mrf.mxu0
    %v521 = vadd.f32 %v409, %v520
    %v522 = vpop.f32.mrf.mxu0
    %523 = vmatprep.mubr.f32.mxu0 0.0
    %524 = vmatmul.mubr.f32.gmra.mxu0 %v424
    %v525 = vpop.f32.mrf.mxu0
    %v526 = vadd.f32 %v409, %v525
    %v527 = vpop.f32.mrf.mxu0
    %528 = vmatprep.mubr.f32.mxu0 0.0
    %529 = vmatmul.mubr.f32.gmra.mxu0 %v427
    %v530 = vpop.f32.mrf.mxu0
    %v531 = vadd.f32 %v409, %v530
    %v532 = vpop.f32.mrf.mxu0
    %533 = vmatprep.mubr.f32.mxu0 0.0
    %534 = vmatmul.mubr.f32.gmra.mxu0 %v430
    %v535 = vpop.f32.mrf.mxu0
    %v536 = vadd.f32 %v409, %v535
    %v537 = vpop.f32.mrf.mxu0
    %538 = vmatprep.mubr.f32.mxu0 0.0
    %539 = vmatmul.mubr.f32.gmra.mxu0 %v433
    %v540 = vpop.f32.mrf.mxu0
    %v541 = vadd.f32 %v409, %v540
    %v542 = vpop.f32.mrf.mxu0
    %543 = vdwg.mxu0
    %v544 = vld [vmem:[%s0 + $0x58] sm:$0xff]
    %v545 = vld [vmem:[%s0 + $0x60] sm:$0xff]
    %v546 = vld [vmem:[%s0 + $0x68] sm:$0xff]
    %v547 = vld [vmem:[%s0 + $0x70] sm:$0xff]
    %v548 = vld [vmem:[%s0 + $0x78] sm:$0xff]
    %v549 = vld [vmem:[%s0 + $0x80] sm:$0xff]
    %v550 = vld [vmem:[%s0 + $0x88] sm:$0xff]
    %v551 = vld [vmem:[%s0 + $0x90] sm:$0xff]
    %v552 = vld [vmem:[%s0 + $0x50] sm:$0x1]
    %v554 = vsel %vm119, %v340, 0
    %v557 = vsel %vm119, %v341, 0
    %v560 = vsel %vm119, %v342, 0
    %v563 = vsel %vm119, %v343, 0
    %v566 = vsel %vm119, %v344, 0
    %v569 = vsel %vm119, %v345, 0
    %v572 = vsel %vm119, %v346, 0
    %v575 = vsel %vm119, %v347, 0
    %v578 = vsel %vm119, %v348, 0
    %v581 = vsel %vm119, %v349, 0
    %v584 = vsel %vm119, %v350, 0
    %v587 = vsel %vm119, %v351, 0
    %v590 = vsel %vm119, %v352, 0
    %v593 = vsel %vm119, %v353, 0
    %v596 = vsel %vm119, %v354, 0
    %v599 = vsel %vm119, %v355, 0
    %601 = vmatprep.subr.mxu0 0.0
    %602 = vmatpush1.msra.mxu0 0.0
    %603 = vmatprep.subr.mxu0 0.0
    %604 = vmatpush1.msra.mxu0 0.0
    %605 = vmatprep.subr.mxu0 0.0
    %606 = vmatpush1.msra.mxu0 0.0
    %607 = vmatprep.subr.mxu0 0.0
    %608 = vmatpush1.msra.mxu0 0.0
    %609 = vmatprep.subr.mxu0 0.0
    %610 = vmatpush1.msra.mxu0 0.0
    %611 = vmatprep.subr.mxu0 0.0
    %612 = vmatpush1.msra.mxu0 0.0
    %613 = vmatprep.subr.mxu0 0.0
    %614 = vmatpush1.msra.mxu0 0.0
    %615 = vmatprep.subr.mxu0 0.0
    %616 = vmatpush1.msra.mxu0 0.0
    %617 = vmatprep.subr.mxu0 0.0
    %618 = vmatpush1.msra.mxu0 0.0
    %619 = vmatprep.subr.mxu0 0.0
    %620 = vmatpush1.msra.mxu0 0.0
    %621 = vmatprep.subr.mxu0 0.0
    %622 = vmatpush1.msra.mxu0 0.0
    %623 = vmatprep.subr.mxu0 0.0
    %624 = vmatpush1.msra.mxu0 0.0
    %625 = vmatprep.subr.mxu0 0.0
    %626 = vmatpush1.msra.mxu0 %v299
    %627 = vmatprep.subr.mxu0 0.0
    %628 = vmatpush1.msra.mxu0 %v294
    %629 = vmatprep.subr.mxu0 0.0
    %630 = vmatpush1.msra.mxu0 %v289
    %631 = vmatprep.subr.mxu0 0.0
    %632 = vmatpush1.msra.mxu0 %v284
    %633 = vmatprep.subr.mxu0 0.0
    %634 = vmatpush2.msra.mxu0 0.0
    %635 = vmatprep.subr.mxu0 0.0
    %636 = vmatpush2.msra.mxu0 0.0
    %637 = vmatprep.subr.mxu0 0.0
    %638 = vmatpush2.msra.mxu0 0.0
    %639 = vmatprep.subr.mxu0 0.0
    %640 = vmatpush2.msra.mxu0 0.0
    %641 = vmatprep.subr.mxu0 0.0
    %642 = vmatpush2.msra.mxu0 0.0
    %643 = vmatprep.subr.mxu0 0.0
    %644 = vmatpush2.msra.mxu0 0.0
    %645 = vmatprep.subr.mxu0 0.0
    %646 = vmatpush2.msra.mxu0 0.0
    %647 = vmatprep.subr.mxu0 0.0
    %648 = vmatpush2.msra.mxu0 0.0
    %649 = vmatprep.subr.mxu0 0.0
    %650 = vmatpush2.msra.mxu0 0.0
    %651 = vmatprep.subr.mxu0 0.0
    %652 = vmatpush2.msra.mxu0 0.0
    %653 = vmatprep.subr.mxu0 0.0
    %654 = vmatpush2.msra.mxu0 0.0
    %655 = vmatprep.subr.mxu0 0.0
    %656 = vmatpush2.msra.mxu0 0.0
    %657 = vmatprep.subr.mxu0 0.0
    %658 = vmatpush2.msra.mxu0 0.0
    %659 = vmatprep.subr.mxu0 0.0
    %660 = vmatpush2.msra.mxu0 0.0
    %661 = vmatprep.subr.mxu0 0.0
    %662 = vmatpush2.msra.mxu0 0.0
    %663 = vmatprep.subr.mxu0 0.0
    %664 = vmatpush2.msra.mxu0 0.0
    %665 = vmatprep.mubr.f32.mxu0 0.0
    %666 = vmatmul.mubr.f32.gmra.mxu0 %v554
    %v667 = vpop.f32.mrf.mxu0
    %v668 = vadd.f32 0.0, %v667
    %v669 = vpop.f32.mrf.mxu0
    %670 = vmatprep.mubr.f32.mxu0 0.0
    %671 = vmatmul.mubr.f32.gmra.mxu0 %v557
    %v672 = vpop.f32.mrf.mxu0
    %v673 = vadd.f32 0.0, %v672
    %v674 = vpop.f32.mrf.mxu0
    %675 = vmatprep.mubr.f32.mxu0 0.0
    %676 = vmatmul.mubr.f32.gmra.mxu0 %v560
    %v677 = vpop.f32.mrf.mxu0
    %v678 = vadd.f32 0.0, %v677
    %v679 = vpop.f32.mrf.mxu0
    %680 = vmatprep.mubr.f32.mxu0 0.0
    %681 = vmatmul.mubr.f32.gmra.mxu0 %v563
    %v682 = vpop.f32.mrf.mxu0
    %v683 = vadd.f32 0.0, %v682
    %v684 = vpop.f32.mrf.mxu0
    %685 = vmatprep.mubr.f32.mxu0 0.0
    %686 = vmatmul.mubr.f32.gmra.mxu0 %v566
    %v687 = vpop.f32.mrf.mxu0
    %v688 = vadd.f32 0.0, %v687
    %v689 = vpop.f32.mrf.mxu0
    %690 = vmatprep.mubr.f32.mxu0 0.0
    %691 = vmatmul.mubr.f32.gmra.mxu0 %v569
    %v692 = vpop.f32.mrf.mxu0
    %v693 = vadd.f32 0.0, %v692
    %v694 = vpop.f32.mrf.mxu0
    %695 = vmatprep.mubr.f32.mxu0 0.0
    %696 = vmatmul.mubr.f32.gmra.mxu0 %v572
    %v697 = vpop.f32.mrf.mxu0
    %v698 = vadd.f32 0.0, %v697
    %v699 = vpop.f32.mrf.mxu0
    %700 = vmatprep.mubr.f32.mxu0 0.0
    %701 = vmatmul.mubr.f32.gmra.mxu0 %v575
    %v702 = vpop.f32.mrf.mxu0
    %v703 = vadd.f32 0.0, %v702
    %v704 = vpop.f32.mrf.mxu0
    %705 = vmatprep.mubr.f32.mxu0 0.0
    %706 = vmatmul.mubr.f32.gmra.mxu0 %v578
    %v707 = vpop.f32.mrf.mxu0
    %v708 = vadd.f32 0.0, %v707
    %v709 = vpop.f32.mrf.mxu0
    %710 = vmatprep.mubr.f32.mxu0 0.0
    %711 = vmatmul.mubr.f32.gmra.mxu0 %v581
    %v712 = vpop.f32.mrf.mxu0
    %v713 = vadd.f32 0.0, %v712
    %v714 = vpop.f32.mrf.mxu0
    %715 = vmatprep.mubr.f32.mxu0 0.0
    %716 = vmatmul.mubr.f32.gmra.mxu0 %v584
    %v717 = vpop.f32.mrf.mxu0
    %v718 = vadd.f32 0.0, %v717
    %v719 = vpop.f32.mrf.mxu0
    %720 = vmatprep.mubr.f32.mxu0 0.0
    %721 = vmatmul.mubr.f32.gmra.mxu0 %v587
    %v722 = vpop.f32.mrf.mxu0
    %v723 = vadd.f32 0.0, %v722
    %v724 = vpop.f32.mrf.mxu0
    %725 = vmatprep.mubr.f32.mxu0 0.0
    %726 = vmatmul.mubr.f32.gmra.mxu0 %v590
    %v727 = vpop.f32.mrf.mxu0
    %v728 = vadd.f32 0.0, %v727
    %v729 = vpop.f32.mrf.mxu0
    %730 = vmatprep.mubr.f32.mxu0 0.0
    %731 = vmatmul.mubr.f32.gmra.mxu0 %v593
    %v732 = vpop.f32.mrf.mxu0
    %v733 = vadd.f32 0.0, %v732
    %v734 = vpop.f32.mrf.mxu0
    %735 = vmatprep.mubr.f32.mxu0 0.0
    %736 = vmatmul.mubr.f32.gmra.mxu0 %v596
    %v737 = vpop.f32.mrf.mxu0
    %v738 = vadd.f32 0.0, %v737
    %v739 = vpop.f32.mrf.mxu0
    %740 = vmatprep.mubr.f32.mxu0 0.0
    %741 = vmatmul.mubr.f32.gmra.mxu0 %v599
    %v742 = vpop.f32.mrf.mxu0
    %v743 = vadd.f32 0.0, %v742
    %v744 = vpop.f32.mrf.mxu0
    %745 = vdwg.mxu0
    %v747 = vsel %vm119, %v668, 0
    %v750 = vsel %vm119, %v673, 0
    %v753 = vsel %vm119, %v678, 0
    %v756 = vsel %vm119, %v683, 0
    %v759 = vsel %vm119, %v688, 0
    %v762 = vsel %vm119, %v693, 0
    %v765 = vsel %vm119, %v698, 0
    %v768 = vsel %vm119, %v703, 0
    %v771 = vsel %vm119, %v708, 0
    %v774 = vsel %vm119, %v713, 0
    %v777 = vsel %vm119, %v718, 0
    %v780 = vsel %vm119, %v723, 0
    %v783 = vsel %vm119, %v728, 0
    %v786 = vsel %vm119, %v733, 0
    %v789 = vsel %vm119, %v738, 0
    %v792 = vsel %vm119, %v743, 0
    %794 = vmatprep.subr.mxu0 0.0
    %795 = vmatpush1.msra.mxu0 0.0
    %796 = vmatprep.subr.mxu0 0.0
    %797 = vmatpush1.msra.mxu0 0.0
    %798 = vmatprep.subr.mxu0 0.0
    %799 = vmatpush1.msra.mxu0 0.0
    %800 = vmatprep.subr.mxu0 0.0
    %801 = vmatpush1.msra.mxu0 0.0
    %802 = vmatprep.subr.mxu0 0.0
    %803 = vmatpush1.msra.mxu0 0.0
    %804 = vmatprep.subr.mxu0 0.0
    %805 = vmatpush1.msra.mxu0 0.0
    %806 = vmatprep.subr.mxu0 0.0
    %807 = vmatpush1.msra.mxu0 0.0
    %808 = vmatprep.subr.mxu0 0.0
    %809 = vmatpush1.msra.mxu0 0.0
    %810 = vmatprep.subr.mxu0 0.0
    %811 = vmatpush1.msra.mxu0 0.0
    %812 = vmatprep.subr.mxu0 0.0
    %813 = vmatpush1.msra.mxu0 0.0
    %814 = vmatprep.subr.mxu0 0.0
    %815 = vmatpush1.msra.mxu0 0.0
    %816 = vmatprep.subr.mxu0 0.0
    %817 = vmatpush1.msra.mxu0 0.0
    %818 = vmatprep.subr.mxu0 0.0
    %819 = vmatpush1.msra.mxu0 %v547
    %820 = vmatprep.subr.mxu0 0.0
    %821 = vmatpush1.msra.mxu0 %v546
    %822 = vmatprep.subr.mxu0 0.0
    %823 = vmatpush1.msra.mxu0 %v545
    %824 = vmatprep.subr.mxu0 0.0
    %825 = vmatpush1.msra.mxu0 %v544
    %826 = vmatprep.subr.mxu0 0.0
    %827 = vmatpush2.msra.mxu0 0.0
    %828 = vmatprep.subr.mxu0 0.0
    %829 = vmatpush2.msra.mxu0 0.0
    %830 = vmatprep.subr.mxu0 0.0
    %831 = vmatpush2.msra.mxu0 0.0
    %832 = vmatprep.subr.mxu0 0.0
    %833 = vmatpush2.msra.mxu0 0.0
    %834 = vmatprep.subr.mxu0 0.0
    %835 = vmatpush2.msra.mxu0 0.0
    %836 = vmatprep.subr.mxu0 0.0
    %837 = vmatpush2.msra.mxu0 0.0
    %838 = vmatprep.subr.mxu0 0.0
    %839 = vmatpush2.msra.mxu0 0.0
    %840 = vmatprep.subr.mxu0 0.0
    %841 = vmatpush2.msra.mxu0 0.0
    %842 = vmatprep.subr.mxu0 0.0
    %843 = vmatpush2.msra.mxu0 0.0
    %844 = vmatprep.subr.mxu0 0.0
    %845 = vmatpush2.msra.mxu0 0.0
    %846 = vmatprep.subr.mxu0 0.0
    %847 = vmatpush2.msra.mxu0 0.0
    %848 = vmatprep.subr.mxu0 0.0
    %849 = vmatpush2.msra.mxu0 0.0
    %850 = vmatprep.subr.mxu0 0.0
    %851 = vmatpush2.msra.mxu0 0.0
    %852 = vmatprep.subr.mxu0 0.0
    %853 = vmatpush2.msra.mxu0 0.0
    %854 = vmatprep.subr.mxu0 0.0
    %855 = vmatpush2.msra.mxu0 0.0
    %856 = vmatprep.subr.mxu0 0.0
    %857 = vmatpush2.msra.mxu0 0.0
    %858 = vmatprep.mubr.f32.mxu0 0.0
    %859 = vmatmul.mubr.f32.gmra.mxu0 %v747
    %v860 = vpop.f32.mrf.mxu0
    %v861 = vadd.f32 0.0, %v860
    %v862 = vpop.f32.mrf.mxu0
    %863 = vmatprep.mubr.f32.mxu0 0.0
    %864 = vmatmul.mubr.f32.gmra.mxu0 %v750
    %v865 = vpop.f32.mrf.mxu0
    %v866 = vadd.f32 0.0, %v865
    %v867 = vpop.f32.mrf.mxu0
    %868 = vmatprep.mubr.f32.mxu0 0.0
    %869 = vmatmul.mubr.f32.gmra.mxu0 %v753
    %v870 = vpop.f32.mrf.mxu0
    %v871 = vadd.f32 0.0, %v870
    %v872 = vpop.f32.mrf.mxu0
    %873 = vmatprep.mubr.f32.mxu0 0.0
    %874 = vmatmul.mubr.f32.gmra.mxu0 %v756
    %v875 = vpop.f32.mrf.mxu0
    %v876 = vadd.f32 0.0, %v875
    %v877 = vpop.f32.mrf.mxu0
    %878 = vmatprep.mubr.f32.mxu0 0.0
    %879 = vmatmul.mubr.f32.gmra.mxu0 %v759
    %v880 = vpop.f32.mrf.mxu0
    %v881 = vadd.f32 0.0, %v880
    %v882 = vpop.f32.mrf.mxu0
    %883 = vmatprep.mubr.f32.mxu0 0.0
    %884 = vmatmul.mubr.f32.gmra.mxu0 %v762
    %v885 = vpop.f32.mrf.mxu0
    %v886 = vadd.f32 0.0, %v885
    %v887 = vpop.f32.mrf.mxu0
    %888 = vmatprep.mubr.f32.mxu0 0.0
    %889 = vmatmul.mubr.f32.gmra.mxu0 %v765
    %v890 = vpop.f32.mrf.mxu0
    %v891 = vadd.f32 0.0, %v890
    %v892 = vpop.f32.mrf.mxu0
    %893 = vmatprep.mubr.f32.mxu0 0.0
    %894 = vmatmul.mubr.f32.gmra.mxu0 %v768
    %v895 = vpop.f32.mrf.mxu0
    %v896 = vadd.f32 0.0, %v895
    %v897 = vpop.f32.mrf.mxu0
    %898 = vmatprep.mubr.f32.mxu0 0.0
    %899 = vmatmul.mubr.f32.gmra.mxu0 %v771
    %v900 = vpop.f32.mrf.mxu0
    %v901 = vadd.f32 0.0, %v900
    %v902 = vpop.f32.mrf.mxu0
    %903 = vmatprep.mubr.f32.mxu0 0.0
    %904 = vmatmul.mubr.f32.gmra.mxu0 %v774
    %v905 = vpop.f32.mrf.mxu0
    %v906 = vadd.f32 0.0, %v905
    %v907 = vpop.f32.mrf.mxu0
    %908 = vmatprep.mubr.f32.mxu0 0.0
    %909 = vmatmul.mubr.f32.gmra.mxu0 %v777
    %v910 = vpop.f32.mrf.mxu0
    %v911 = vadd.f32 0.0, %v910
    %v912 = vpop.f32.mrf.mxu0
    %913 = vmatprep.mubr.f32.mxu0 0.0
    %914 = vmatmul.mubr.f32.gmra.mxu0 %v780
    %v915 = vpop.f32.mrf.mxu0
    %v916 = vadd.f32 0.0, %v915
    %v917 = vpop.f32.mrf.mxu0
    %918 = vmatprep.mubr.f32.mxu0 0.0
    %919 = vmatmul.mubr.f32.gmra.mxu0 %v783
    %v920 = vpop.f32.mrf.mxu0
    %v921 = vadd.f32 0.0, %v920
    %v922 = vpop.f32.mrf.mxu0
    %923 = vmatprep.mubr.f32.mxu0 0.0
    %924 = vmatmul.mubr.f32.gmra.mxu0 %v786
    %v925 = vpop.f32.mrf.mxu0
    %v926 = vadd.f32 0.0, %v925
    %v927 = vpop.f32.mrf.mxu0
    %928 = vmatprep.mubr.f32.mxu0 0.0
    %929 = vmatmul.mubr.f32.gmra.mxu0 %v789
    %v930 = vpop.f32.mrf.mxu0
    %v931 = vadd.f32 0.0, %v930
    %v932 = vpop.f32.mrf.mxu0
    %933 = vmatprep.mubr.f32.mxu0 0.0
    %934 = vmatmul.mubr.f32.gmra.mxu0 %v792
    %v935 = vpop.f32.mrf.mxu0
    %v936 = vadd.f32 0.0, %v935
    %v937 = vpop.f32.mrf.mxu0
    %938 = vdwg.mxu0
    %947 = vrot.lane.b32.xlu0 %v901, 96
    %v948 = vpop.permute.xlu0 %947
    %949 = vrot.lane.b32.xlu0 %v906, 96
    %v950 = vpop.permute.xlu0 %949
    %951 = vrot.lane.b32.xlu0 %v911, 96
    %v952 = vpop.permute.xlu0 %951
    %953 = vrot.lane.b32.xlu0 %v916, 96
    %v954 = vpop.permute.xlu0 %953
    %955 = vrot.lane.b32.xlu0 %v921, 96
    %v956 = vpop.permute.xlu0 %955
    %957 = vrot.lane.b32.xlu0 %v926, 96
    %v958 = vpop.permute.xlu0 %957
    %959 = vrot.lane.b32.xlu0 %v931, 96
    %v960 = vpop.permute.xlu0 %959
    %961 = vrot.lane.b32.xlu0 %v936, 96
    %v962 = vpop.permute.xlu0 %961
    %v971 = vadd.f32 %v861, %v948
    %v972 = vadd.f32 %v866, %v950
    %v973 = vadd.f32 %v871, %v952
    %v974 = vadd.f32 %v876, %v954
    %v975 = vadd.f32 %v881, %v956
    %v976 = vadd.f32 %v886, %v958
    %v977 = vadd.f32 %v891, %v960
    %v978 = vadd.f32 %v896, %v962
    %v979 = vadd.f32 %v971, %v506
    %v980 = vadd.f32 %v972, %v511
    %v981 = vadd.f32 %v973, %v516
    %v982 = vadd.f32 %v974, %v521
    %v983 = vadd.f32 %v975, %v526
    %v984 = vadd.f32 %v976, %v531
    %v985 = vadd.f32 %v977, %v536
    %v986 = vadd.f32 %v978, %v541
    %995 = vrot.lane.b32.xlu0 %v861, 96
    %v996 = vpop.permute.xlu0 %995
    %997 = vrot.lane.b32.xlu0 %v866, 96
    %v998 = vpop.permute.xlu0 %997
    %999 = vrot.lane.b32.xlu0 %v871, 96
    %v1000 = vpop.permute.xlu0 %999
    %1001 = vrot.lane.b32.xlu0 %v876, 96
    %v1002 = vpop.permute.xlu0 %1001
    %1003 = vrot.lane.b32.xlu0 %v881, 96
    %v1004 = vpop.permute.xlu0 %1003
    %1005 = vrot.lane.b32.xlu0 %v886, 96
    %v1006 = vpop.permute.xlu0 %1005
    %1007 = vrot.lane.b32.xlu0 %v891, 96
    %v1008 = vpop.permute.xlu0 %1007
    %1009 = vrot.lane.b32.xlu0 %v896, 96
    %v1010 = vpop.permute.xlu0 %1009
    %v1019 = vadd.f32 %v901, %v996
    %v1020 = vadd.f32 %v906, %v998
    %v1021 = vadd.f32 %v911, %v1000
    %v1022 = vadd.f32 %v916, %v1002
    %v1023 = vadd.f32 %v921, %v1004
    %v1024 = vadd.f32 %v926, %v1006
    %v1025 = vadd.f32 %v931, %v1008
    %v1026 = vadd.f32 %v936, %v1010
    %v1027 = vadd.f32 %v1019, %v506
    %v1028 = vadd.f32 %v1020, %v511
    %v1029 = vadd.f32 %v1021, %v516
    %v1030 = vadd.f32 %v1022, %v521
    %v1031 = vadd.f32 %v1023, %v526
    %v1032 = vadd.f32 %v1024, %v531
    %v1033 = vadd.f32 %v1025, %v536
    %v1034 = vadd.f32 %v1026, %v541
    %v1035 = vtanh.pop %v979
    %v1036 = vtanh.pop %v980
    %v1037 = vtanh.pop %v981
    %v1038 = vtanh.pop %v982
    %v1039 = vtanh.pop %v983
    %v1040 = vtanh.pop %v984
    %v1041 = vtanh.pop %v985
    %v1042 = vtanh.pop %v986
    %v1043 = vtanh.pop %v1027
    %v1044 = vtanh.pop %v1028
    %v1045 = vtanh.pop %v1029
    %v1046 = vtanh.pop %v1030
    %v1047 = vtanh.pop %v1031
    %v1048 = vtanh.pop %v1032
    %v1049 = vtanh.pop %v1033
    %v1050 = vtanh.pop %v1034
    %v1051 = vlaneseq
    %v1052 = vshrl.u32 %v1051, 7
    %v1053 = vsub.s32 0, %v1052
    %v1054 = vrot.slane %v552, %v1053
    %v1056 = vsel %vm119, %v1035, 0
    %v1059 = vsel %vm119, %v1036, 0
    %v1062 = vsel %vm119, %v1037, 0
    %v1065 = vsel %vm119, %v1038, 0
    %v1068 = vsel %vm119, %v1039, 0
    %v1071 = vsel %vm119, %v1040, 0
    %v1074 = vsel %vm119, %v1041, 0
    %v1077 = vsel %vm119, %v1042, 0
    %v1080 = vsel %vm119, %v1043, 0
    %v1083 = vsel %vm119, %v1044, 0
    %v1086 = vsel %vm119, %v1045, 0
    %v1089 = vsel %vm119, %v1046, 0
    %v1092 = vsel %vm119, %v1047, 0
    %v1095 = vsel %vm119, %v1048, 0
    %v1098 = vsel %vm119, %v1049, 0
    %v1101 = vsel %vm119, %v1050, 0
    %1103 = vmatprep.subr.mxu0 0.0
    %1104 = vmatpush1.msra.mxu0 0.0
    %1105 = vmatprep.subr.mxu0 0.0
    %1106 = vmatpush1.msra.mxu0 0.0
    %1107 = vmatprep.subr.mxu0 0.0
    %1108 = vmatpush1.msra.mxu0 0.0
    %1109 = vmatprep.subr.mxu0 0.0
    %1110 = vmatpush1.msra.mxu0 0.0
    %1111 = vmatprep.subr.mxu0 0.0
    %1112 = vmatpush1.msra.mxu0 0.0
    %1113 = vmatprep.subr.mxu0 0.0
    %1114 = vmatpush1.msra.mxu0 0.0
    %1115 = vmatprep.subr.mxu0 0.0
    %1116 = vmatpush1.msra.mxu0 0.0
    %1117 = vmatprep.subr.mxu0 0.0
    %1118 = vmatpush1.msra.mxu0 0.0
    %1119 = vmatprep.subr.mxu0 0.0
    %1120 = vmatpush1.msra.mxu0 0.0
    %1121 = vmatprep.subr.mxu0 0.0
    %1122 = vmatpush1.msra.mxu0 0.0
    %1123 = vmatprep.subr.mxu0 0.0
    %1124 = vmatpush1.msra.mxu0 0.0
    %1125 = vmatprep.subr.mxu0 0.0
    %1126 = vmatpush1.msra.mxu0 0.0
    %1127 = vmatprep.subr.mxu0 0.0
    %1128 = vmatpush1.msra.mxu0 %v551
    %1129 = vmatprep.subr.mxu0 0.0
    %1130 = vmatpush1.msra.mxu0 %v550
    %1131 = vmatprep.subr.mxu0 0.0
    %1132 = vmatpush1.msra.mxu0 %v549
    %1133 = vmatprep.subr.mxu0 0.0
    %1134 = vmatpush1.msra.mxu0 %v548
    %1135 = vmatprep.subr.mxu0 0.0
    %1136 = vmatpush2.msra.mxu0 0.0
    %1137 = vmatprep.subr.mxu0 0.0
    %1138 = vmatpush2.msra.mxu0 0.0
    %1139 = vmatprep.subr.mxu0 0.0
    %1140 = vmatpush2.msra.mxu0 0.0
    %1141 = vmatprep.subr.mxu0 0.0
    %1142 = vmatpush2.msra.mxu0 0.0
    %1143 = vmatprep.subr.mxu0 0.0
    %1144 = vmatpush2.msra.mxu0 0.0
    %1145 = vmatprep.subr.mxu0 0.0
    %1146 = vmatpush2.msra.mxu0 0.0
    %1147 = vmatprep.subr.mxu0 0.0
    %1148 = vmatpush2.msra.mxu0 0.0
    %1149 = vmatprep.subr.mxu0 0.0
    %1150 = vmatpush2.msra.mxu0 0.0
    %1151 = vmatprep.subr.mxu0 0.0
    %1152 = vmatpush2.msra.mxu0 0.0
    %1153 = vmatprep.subr.mxu0 0.0
    %1154 = vmatpush2.msra.mxu0 0.0
    %1155 = vmatprep.subr.mxu0 0.0
    %1156 = vmatpush2.msra.mxu0 0.0
    %1157 = vmatprep.subr.mxu0 0.0
    %1158 = vmatpush2.msra.mxu0 0.0
    %1159 = vmatprep.subr.mxu0 0.0
    %1160 = vmatpush2.msra.mxu0 0.0
    %1161 = vmatprep.subr.mxu0 0.0
    %1162 = vmatpush2.msra.mxu0 0.0
    %1163 = vmatprep.subr.mxu0 0.0
    %1164 = vmatpush2.msra.mxu0 0.0
    %1165 = vmatprep.subr.mxu0 0.0
    %1166 = vmatpush2.msra.mxu0 0.0
    %1167 = vmatprep.mubr.f32.mxu0 0.0
    %1168 = vmatmul.mubr.f32.gmra.mxu0 %v1056
    %v1169 = vpop.f32.mrf.mxu0
    %v1170 = vadd.f32 %v1054, %v1169
    %v1171 = vpop.f32.mrf.mxu0
    %1172 = vmatprep.mubr.f32.mxu0 0.0
    %1173 = vmatmul.mubr.f32.gmra.mxu0 %v1059
    %v1174 = vpop.f32.mrf.mxu0
    %v1175 = vadd.f32 %v1054, %v1174
    %v1176 = vpop.f32.mrf.mxu0
    %1177 = vmatprep.mubr.f32.mxu0 0.0
    %1178 = vmatmul.mubr.f32.gmra.mxu0 %v1062
    %v1179 = vpop.f32.mrf.mxu0
    %v1180 = vadd.f32 %v1054, %v1179
    %v1181 = vpop.f32.mrf.mxu0
    %1182 = vmatprep.mubr.f32.mxu0 0.0
    %1183 = vmatmul.mubr.f32.gmra.mxu0 %v1065
    %v1184 = vpop.f32.mrf.mxu0
    %v1185 = vadd.f32 %v1054, %v1184
    %v1186 = vpop.f32.mrf.mxu0
    %1187 = vmatprep.mubr.f32.mxu0 0.0
    %1188 = vmatmul.mubr.f32.gmra.mxu0 %v1068
    %v1189 = vpop.f32.mrf.mxu0
    %v1190 = vadd.f32 %v1054, %v1189
    %v1191 = vpop.f32.mrf.mxu0
    %1192 = vmatprep.mubr.f32.mxu0 0.0
    %1193 = vmatmul.mubr.f32.gmra.mxu0 %v1071
    %v1194 = vpop.f32.mrf.mxu0
    %v1195 = vadd.f32 %v1054, %v1194
    %v1196 = vpop.f32.mrf.mxu0
    %1197 = vmatprep.mubr.f32.mxu0 0.0
    %1198 = vmatmul.mubr.f32.gmra.mxu0 %v1074
    %v1199 = vpop.f32.mrf.mxu0
    %v1200 = vadd.f32 %v1054, %v1199
    %v1201 = vpop.f32.mrf.mxu0
    %1202 = vmatprep.mubr.f32.mxu0 0.0
    %1203 = vmatmul.mubr.f32.gmra.mxu0 %v1077
    %v1204 = vpop.f32.mrf.mxu0
    %v1205 = vadd.f32 %v1054, %v1204
    %v1206 = vpop.f32.mrf.mxu0
    %1207 = vmatprep.mubr.f32.mxu0 0.0
    %1208 = vmatmul.mubr.f32.gmra.mxu0 %v1080
    %v1209 = vpop.f32.mrf.mxu0
    %v1210 = vadd.f32 %v1054, %v1209
    %v1211 = vpop.f32.mrf.mxu0
    %1212 = vmatprep.mubr.f32.mxu0 0.0
    %1213 = vmatmul.mubr.f32.gmra.mxu0 %v1083
    %v1214 = vpop.f32.mrf.mxu0
    %v1215 = vadd.f32 %v1054, %v1214
    %v1216 = vpop.f32.mrf.mxu0
    %1217 = vmatprep.mubr.f32.mxu0 0.0
    %1218 = vmatmul.mubr.f32.gmra.mxu0 %v1086
    %v1219 = vpop.f32.mrf.mxu0
    %v1220 = vadd.f32 %v1054, %v1219
    %v1221 = vpop.f32.mrf.mxu0
    %1222 = vmatprep.mubr.f32.mxu0 0.0
    %1223 = vmatmul.mubr.f32.gmra.mxu0 %v1089
    %v1224 = vpop.f32.mrf.mxu0
    %v1225 = vadd.f32 %v1054, %v1224
    %v1226 = vpop.f32.mrf.mxu0
    %1227 = vmatprep.mubr.f32.mxu0 0.0
    %1228 = vmatmul.mubr.f32.gmra.mxu0 %v1092
    %v1229 = vpop.f32.mrf.mxu0
    %v1230 = vadd.f32 %v1054, %v1229
    %v1231 = vpop.f32.mrf.mxu0
    %1232 = vmatprep.mubr.f32.mxu0 0.0
    %1233 = vmatmul.mubr.f32.gmra.mxu0 %v1095
    %v1234 = vpop.f32.mrf.mxu0
    %v1235 = vadd.f32 %v1054, %v1234
    %v1236 = vpop.f32.mrf.mxu0
    %1237 = vmatprep.mubr.f32.mxu0 0.0
    %1238 = vmatmul.mubr.f32.gmra.mxu0 %v1098
    %v1239 = vpop.f32.mrf.mxu0
    %v1240 = vadd.f32 %v1054, %v1239
    %v1241 = vpop.f32.mrf.mxu0
    %1242 = vmatprep.mubr.f32.mxu0 0.0
    %1243 = vmatmul.mubr.f32.gmra.mxu0 %v1101
    %v1244 = vpop.f32.mrf.mxu0
    %v1245 = vadd.f32 %v1054, %v1244
    %v1246 = vpop.f32.mrf.mxu0
    %1247 = vdwg.mxu0
    %v1248 = vtanh.pop %v1170
    %v1249 = vtanh.pop %v1175
    %v1250 = vtanh.pop %v1180
    %v1251 = vtanh.pop %v1185
    %v1252 = vtanh.pop %v1190
    %v1253 = vtanh.pop %v1195
    %v1254 = vtanh.pop %v1200
    %v1255 = vtanh.pop %v1205
    %v1256 = vtanh.pop %v1210
    %v1257 = vtanh.pop %v1215
    %v1258 = vtanh.pop %v1220
    %v1259 = vtanh.pop %v1225
    %v1260 = vtanh.pop %v1230
    %v1261 = vtanh.pop %v1235
    %v1262 = vtanh.pop %v1240
    %v1263 = vtanh.pop %v1245
    %v1264 = vadd.f32 %v1248, %v1256
    %v1265 = vadd.f32 %v1249, %v1257
    %v1266 = vadd.f32 %v1250, %v1258
    %v1267 = vadd.f32 %v1251, %v1259
    %v1268 = vadd.f32 %v1252, %v1260
    %v1269 = vadd.f32 %v1253, %v1261
    %v1270 = vadd.f32 %v1254, %v1262
    %v1271 = vadd.f32 %v1255, %v1263
    %v1272 = vmul.f32 %v1264, 0.5
    %v1273 = vmul.f32 %v1265, 0.5
    %v1274 = vmul.f32 %v1266, 0.5
    %v1275 = vmul.f32 %v1267, 0.5
    %v1276 = vmul.f32 %v1268, 0.5
    %v1277 = vmul.f32 %v1269, 0.5
    %v1278 = vmul.f32 %v1270, 0.5
    %v1279 = vmul.f32 %v1271, 0.5
    %vm1280 = vcmask 523264
    %v1282 = vsel %vm1280, %v372, 0
    %v1285 = vsel %vm1280, %v373, 0
    %v1288 = vsel %vm1280, %v374, 0
    %v1291 = vsel %vm1280, %v375, 0
    %1293 = vmatprep.subr.mxu0 0.0
    %1294 = vmatpush1.msra.mxu0 0.0
    %1295 = vmatprep.subr.mxu0 0.0
    %1296 = vmatpush1.msra.mxu0 0.0
    %1297 = vmatprep.subr.mxu0 0.0
    %1298 = vmatpush1.msra.mxu0 0.0
    %1299 = vmatprep.subr.mxu0 0.0
    %1300 = vmatpush1.msra.mxu0 0.0
    %1301 = vmatprep.subr.mxu0 0.0
    %1302 = vmatpush1.msra.mxu0 0.0
    %1303 = vmatprep.subr.mxu0 0.0
    %1304 = vmatpush1.msra.mxu0 0.0
    %1305 = vmatprep.subr.mxu0 0.0
    %1306 = vmatpush1.msra.mxu0 0.0
    %1307 = vmatprep.subr.mxu0 0.0
    %1308 = vmatpush1.msra.mxu0 0.0
    %1309 = vmatprep.subr.mxu0 0.0
    %1310 = vmatpush1.msra.mxu0 %v1279
    %1311 = vmatprep.subr.mxu0 0.0
    %1312 = vmatpush1.msra.mxu0 %v1278
    %1313 = vmatprep.subr.mxu0 0.0
    %1314 = vmatpush1.msra.mxu0 %v1277
    %1315 = vmatprep.subr.mxu0 0.0
    %1316 = vmatpush1.msra.mxu0 %v1276
    %1317 = vmatprep.subr.mxu0 0.0
    %1318 = vmatpush1.msra.mxu0 %v1275
    %1319 = vmatprep.subr.mxu0 0.0
    %1320 = vmatpush1.msra.mxu0 %v1274
    %1321 = vmatprep.subr.mxu0 0.0
    %1322 = vmatpush1.msra.mxu0 %v1273
    %1323 = vmatprep.subr.mxu0 0.0
    %1324 = vmatpush1.msra.mxu0 %v1272
    %1325 = vmatprep.subr.mxu0 0.0
    %1326 = vmatpush2.msra.mxu0 0.0
    %1327 = vmatprep.subr.mxu0 0.0
    %1328 = vmatpush2.msra.mxu0 0.0
    %1329 = vmatprep.subr.mxu0 0.0
    %1330 = vmatpush2.msra.mxu0 0.0
    %1331 = vmatprep.subr.mxu0 0.0
    %1332 = vmatpush2.msra.mxu0 0.0
    %1333 = vmatprep.subr.mxu0 0.0
    %1334 = vmatpush2.msra.mxu0 0.0
    %1335 = vmatprep.subr.mxu0 0.0
    %1336 = vmatpush2.msra.mxu0 0.0
    %1337 = vmatprep.subr.mxu0 0.0
    %1338 = vmatpush2.msra.mxu0 0.0
    %1339 = vmatprep.subr.mxu0 0.0
    %1340 = vmatpush2.msra.mxu0 0.0
    %1341 = vmatprep.subr.mxu0 0.0
    %1342 = vmatpush2.msra.mxu0 0.0
    %1343 = vmatprep.subr.mxu0 0.0
    %1344 = vmatpush2.msra.mxu0 0.0
    %1345 = vmatprep.subr.mxu0 0.0
    %1346 = vmatpush2.msra.mxu0 0.0
    %1347 = vmatprep.subr.mxu0 0.0
    %1348 = vmatpush2.msra.mxu0 0.0
    %1349 = vmatprep.subr.mxu0 0.0
    %1350 = vmatpush2.msra.mxu0 0.0
    %1351 = vmatprep.subr.mxu0 0.0
    %1352 = vmatpush2.msra.mxu0 0.0
    %1353 = vmatprep.subr.mxu0 0.0
    %1354 = vmatpush2.msra.mxu0 0.0
    %1355 = vmatprep.subr.mxu0 0.0
    %1356 = vmatpush2.msra.mxu0 0.0
    %1357 = vmatprep.mubr.f32.mxu0 0.0
    %1358 = vmatmul.mubr.f32.gmra.mxu0 %v1282
    %v1359 = vpop.f32.mrf.mxu0
    %v1360 = vadd.f32 0.0, %v1359
    %v1361 = vpop.f32.mrf.mxu0
    %1362 = vmatprep.mubr.f32.mxu0 0.0
    %1363 = vmatmul.mubr.f32.gmra.mxu0 %v1285
    %v1364 = vpop.f32.mrf.mxu0
    %v1365 = vadd.f32 0.0, %v1364
    %v1366 = vpop.f32.mrf.mxu0
    %1367 = vmatprep.mubr.f32.mxu0 0.0
    %1368 = vmatmul.mubr.f32.gmra.mxu0 %v1288
    %v1369 = vpop.f32.mrf.mxu0
    %v1370 = vadd.f32 0.0, %v1369
    %v1371 = vpop.f32.mrf.mxu0
    %1372 = vmatprep.mubr.f32.mxu0 0.0
    %1373 = vmatmul.mubr.f32.gmra.mxu0 %v1291
    %v1374 = vpop.f32.mrf.mxu0
    %v1375 = vadd.f32 0.0, %v1374
    %v1376 = vpop.f32.mrf.mxu0
    %1377 = vdwg.mxu0
    %v1378 = vmul.f32 %v1360, %v389
    %v1379 = vmul.f32 %v1365, %v391
    %v1380 = vmul.f32 %v1370, %v393
    %v1381 = vmul.f32 %v1375, %v395
    %v1382 = vadd.f32 %v284, %v1378
    %v1383 = vadd.f32 %v289, %v1379
    %v1384 = vadd.f32 %v294, %v1380
    %v1385 = vadd.f32 %v299, %v1381
    %v1386 = vld [vmem:[%s0 + $0x98] sm:$0xff]
    %v1387 = vld [vmem:[%s0 + $0xa0] sm:$0xff]
    %v1388 = vld [vmem:[%s0 + $0xa8] sm:$0xff]
    %v1389 = vld [vmem:[%s0 + $0xb0] sm:$0xff]
    %v1390 = vld [vmem:[%s0 + $0xb8] sm:$0xff]
    %v1391 = vld [vmem:[%s0 + $0xc0] sm:$0xff]
    %v1392 = vld [vmem:[%s0 + $0xc8] sm:$0xff]
    %v1393 = vld [vmem:[%s0 + $0xd0] sm:$0xff]
    %v1394 = vld [vmem:[%s0 + $0x51] sm:$0x1]
    %1395 = vmatprep.subr.mxu0 0.0
    %1396 = vmatpush1.msra.mxu0 0.0
    %1397 = vmatprep.subr.mxu0 0.0
    %1398 = vmatpush1.msra.mxu0 0.0
    %1399 = vmatprep.subr.mxu0 0.0
    %1400 = vmatpush1.msra.mxu0 0.0
    %1401 = vmatprep.subr.mxu0 0.0
    %1402 = vmatpush1.msra.mxu0 0.0
    %1403 = vmatprep.subr.mxu0 0.0
    %1404 = vmatpush1.msra.mxu0 0.0
    %1405 = vmatprep.subr.mxu0 0.0
    %1406 = vmatpush1.msra.mxu0 0.0
    %1407 = vmatprep.subr.mxu0 0.0
    %1408 = vmatpush1.msra.mxu0 0.0
    %1409 = vmatprep.subr.mxu0 0.0
    %1410 = vmatpush1.msra.mxu0 0.0
    %1411 = vmatprep.subr.mxu0 0.0
    %1412 = vmatpush1.msra.mxu0 0.0
    %1413 = vmatprep.subr.mxu0 0.0
    %1414 = vmatpush1.msra.mxu0 0.0
    %1415 = vmatprep.subr.mxu0 0.0
    %1416 = vmatpush1.msra.mxu0 0.0
    %1417 = vmatprep.subr.mxu0 0.0
    %1418 = vmatpush1.msra.mxu0 0.0
    %1419 = vmatprep.subr.mxu0 0.0
    %1420 = vmatpush1.msra.mxu0 %v1385
    %1421 = vmatprep.subr.mxu0 0.0
    %1422 = vmatpush1.msra.mxu0 %v1384
    %1423 = vmatprep.subr.mxu0 0.0
    %1424 = vmatpush1.msra.mxu0 %v1383
    %1425 = vmatprep.subr.mxu0 0.0
    %1426 = vmatpush1.msra.mxu0 %v1382
    %1427 = vmatprep.subr.mxu0 0.0
    %1428 = vmatpush2.msra.mxu0 0.0
    %1429 = vmatprep.subr.mxu0 0.0
    %1430 = vmatpush2.msra.mxu0 0.0
    %1431 = vmatprep.subr.mxu0 0.0
    %1432 = vmatpush2.msra.mxu0 0.0
    %1433 = vmatprep.subr.mxu0 0.0
    %1434 = vmatpush2.msra.mxu0 0.0
    %1435 = vmatprep.subr.mxu0 0.0
    %1436 = vmatpush2.msra.mxu0 0.0
    %1437 = vmatprep.subr.mxu0 0.0
    %1438 = vmatpush2.msra.mxu0 0.0
    %1439 = vmatprep.subr.mxu0 0.0
    %1440 = vmatpush2.msra.mxu0 0.0
    %1441 = vmatprep.subr.mxu0 0.0
    %1442 = vmatpush2.msra.mxu0 0.0
    %1443 = vmatprep.subr.mxu0 0.0
    %1444 = vmatpush2.msra.mxu0 0.0
    %1445 = vmatprep.subr.mxu0 0.0
    %1446 = vmatpush2.msra.mxu0 0.0
    %1447 = vmatprep.subr.mxu0 0.0
    %1448 = vmatpush2.msra.mxu0 0.0
    %1449 = vmatprep.subr.mxu0 0.0
    %1450 = vmatpush2.msra.mxu0 0.0
    %1451 = vmatprep.subr.mxu0 0.0
    %1452 = vmatpush2.msra.mxu0 0.0
    %1453 = vmatprep.subr.mxu0 0.0
    %1454 = vmatpush2.msra.mxu0 0.0
    %1455 = vmatprep.subr.mxu0 0.0
    %1456 = vmatpush2.msra.mxu0 0.0
    %1457 = vmatprep.subr.mxu0 0.0
    %1458 = vmatpush2.msra.mxu0 0.0
    %1459 = vmatprep.mubr.f32.mxu0 0.0
    %1460 = vmatmul.mubr.f32.gmra.mxu0 %v554
    %v1461 = vpop.f32.mrf.mxu0
    %v1462 = vadd.f32 0.0, %v1461
    %v1463 = vpop.f32.mrf.mxu0
    %1464 = vmatprep.mubr.f32.mxu0 0.0
    %1465 = vmatmul.mubr.f32.gmra.mxu0 %v557
    %v1466 = vpop.f32.mrf.mxu0
    %v1467 = vadd.f32 0.0, %v1466
    %v1468 = vpop.f32.mrf.mxu0
    %1469 = vmatprep.mubr.f32.mxu0 0.0
    %1470 = vmatmul.mubr.f32.gmra.mxu0 %v560
    %v1471 = vpop.f32.mrf.mxu0
    %v1472 = vadd.f32 0.0, %v1471
    %v1473 = vpop.f32.mrf.mxu0
    %1474 = vmatprep.mubr.f32.mxu0 0.0
    %1475 = vmatmul.mubr.f32.gmra.mxu0 %v563
    %v1476 = vpop.f32.mrf.mxu0
    %v1477 = vadd.f32 0.0, %v1476
    %v1478 = vpop.f32.mrf.mxu0
    %1479 = vmatprep.mubr.f32.mxu0 0.0
    %1480 = vmatmul.mubr.f32.gmra.mxu0 %v566
    %v1481 = vpop.f32.mrf.mxu0
    %v1482 = vadd.f32 0.0, %v1481
    %v1483 = vpop.f32.mrf.mxu0
    %1484 = vmatprep.mubr.f32.mxu0 0.0
    %1485 = vmatmul.mubr.f32.gmra.mxu0 %v569
    %v1486 = vpop.f32.mrf.mxu0
    %v1487 = vadd.f32 0.0, %v1486
    %v1488 = vpop.f32.mrf.mxu0
    %1489 = vmatprep.mubr.f32.mxu0 0.0
    %1490 = vmatmul.mubr.f32.gmra.mxu0 %v572
    %v1491 = vpop.f32.mrf.mxu0
    %v1492 = vadd.f32 0.0, %v1491
    %v1493 = vpop.f32.mrf.mxu0
    %1494 = vmatprep.mubr.f32.mxu0 0.0
    %1495 = vmatmul.mubr.f32.gmra.mxu0 %v575
    %v1496 = vpop.f32.mrf.mxu0
    %v1497 = vadd.f32 0.0, %v1496
    %v1498 = vpop.f32.mrf.mxu0
    %1499 = vmatprep.mubr.f32.mxu0 0.0
    %1500 = vmatmul.mubr.f32.gmra.mxu0 %v578
    %v1501 = vpop.f32.mrf.mxu0
    %v1502 = vadd.f32 0.0, %v1501
    %v1503 = vpop.f32.mrf.mxu0
    %1504 = vmatprep.mubr.f32.mxu0 0.0
    %1505 = vmatmul.mubr.f32.gmra.mxu0 %v581
    %v1506 = vpop.f32.mrf.mxu0
    %v1507 = vadd.f32 0.0, %v1506
    %v1508 = vpop.f32.mrf.mxu0
    %1509 = vmatprep.mubr.f32.mxu0 0.0
    %1510 = vmatmul.mubr.f32.gmra.mxu0 %v584
    %v1511 = vpop.f32.mrf.mxu0
    %v1512 = vadd.f32 0.0, %v1511
    %v1513 = vpop.f32.mrf.mxu0
    %1514 = vmatprep.mubr.f32.mxu0 0.0
    %1515 = vmatmul.mubr.f32.gmra.mxu0 %v587
    %v1516 = vpop.f32.mrf.mxu0
    %v1517 = vadd.f32 0.0, %v1516
    %v1518 = vpop.f32.mrf.mxu0
    %1519 = vmatprep.mubr.f32.mxu0 0.0
    %1520 = vmatmul.mubr.f32.gmra.mxu0 %v590
    %v1521 = vpop.f32.mrf.mxu0
    %v1522 = vadd.f32 0.0, %v1521
    %v1523 = vpop.f32.mrf.mxu0
    %1524 = vmatprep.mubr.f32.mxu0 0.0
    %1525 = vmatmul.mubr.f32.gmra.mxu0 %v593
    %v1526 = vpop.f32.mrf.mxu0
    %v1527 = vadd.f32 0.0, %v1526
    %v1528 = vpop.f32.mrf.mxu0
    %1529 = vmatprep.mubr.f32.mxu0 0.0
    %1530 = vmatmul.mubr.f32.gmra.mxu0 %v596
    %v1531 = vpop.f32.mrf.mxu0
    %v1532 = vadd.f32 0.0, %v1531
    %v1533 = vpop.f32.mrf.mxu0
    %1534 = vmatprep.mubr.f32.mxu0 0.0
    %1535 = vmatmul.mubr.f32.gmra.mxu0 %v599
    %v1536 = vpop.f32.mrf.mxu0
    %v1537 = vadd.f32 0.0, %v1536
    %v1538 = vpop.f32.mrf.mxu0
    %1539 = vdwg.mxu0
    %v1541 = vsel %vm119, %v1462, 0
    %v1544 = vsel %vm119, %v1467, 0
    %v1547 = vsel %vm119, %v1472, 0
    %v1550 = vsel %vm119, %v1477, 0
    %v1553 = vsel %vm119, %v1482, 0
    %v1556 = vsel %vm119, %v1487, 0
    %v1559 = vsel %vm119, %v1492, 0
    %v1562 = vsel %vm119, %v1497, 0
    %v1565 = vsel %vm119, %v1502, 0
    %v1568 = vsel %vm119, %v1507, 0
    %v1571 = vsel %vm119, %v1512, 0
    %v1574 = vsel %vm119, %v1517, 0
    %v1577 = vsel %vm119, %v1522, 0
    %v1580 = vsel %vm119, %v1527, 0
    %v1583 = vsel %vm119, %v1532, 0
    %v1586 = vsel %vm119, %v1537, 0
    %1588 = vmatprep.subr.mxu0 0.0
    %1589 = vmatpush1.msra.mxu0 0.0
    %1590 = vmatprep.subr.mxu0 0.0
    %1591 = vmatpush1.msra.mxu0 0.0
    %1592 = vmatprep.subr.mxu0 0.0
    %1593 = vmatpush1.msra.mxu0 0.0
    %1594 = vmatprep.subr.mxu0 0.0
    %1595 = vmatpush1.msra.mxu0 0.0
    %1596 = vmatprep.subr.mxu0 0.0
    %1597 = vmatpush1.msra.mxu0 0.0
    %1598 = vmatprep.subr.mxu0 0.0
    %1599 = vmatpush1.msra.mxu0 0.0
    %1600 = vmatprep.subr.mxu0 0.0
    %1601 = vmatpush1.msra.mxu0 0.0
    %1602 = vmatprep.subr.mxu0 0.0
    %1603 = vmatpush1.msra.mxu0 0.0
    %1604 = vmatprep.subr.mxu0 0.0
    %1605 = vmatpush1.msra.mxu0 0.0
    %1606 = vmatprep.subr.mxu0 0.0
    %1607 = vmatpush1.msra.mxu0 0.0
    %1608 = vmatprep.subr.mxu0 0.0
    %1609 = vmatpush1.msra.mxu0 0.0
    %1610 = vmatprep.subr.mxu0 0.0
    %1611 = vmatpush1.msra.mxu0 0.0
    %1612 = vmatprep.subr.mxu0 0.0
    %1613 = vmatpush1.msra.mxu0 %v1389
    %1614 = vmatprep.subr.mxu0 0.0
    %1615 = vmatpush1.msra.mxu0 %v1388
    %1616 = vmatprep.subr.mxu0 0.0
    %1617 = vmatpush1.msra.mxu0 %v1387
    %1618 = vmatprep.subr.mxu0 0.0
    %1619 = vmatpush1.msra.mxu0 %v1386
    %1620 = vmatprep.subr.mxu0 0.0
    %1621 = vmatpush2.msra.mxu0 0.0
    %1622 = vmatprep.subr.mxu0 0.0
    %1623 = vmatpush2.msra.mxu0 0.0
    %1624 = vmatprep.subr.mxu0 0.0
    %1625 = vmatpush2.msra.mxu0 0.0
    %1626 = vmatprep.subr.mxu0 0.0
    %1627 = vmatpush2.msra.mxu0 0.0
    %1628 = vmatprep.subr.mxu0 0.0
    %1629 = vmatpush2.msra.mxu0 0.0
    %1630 = vmatprep.subr.mxu0 0.0
    %1631 = vmatpush2.msra.mxu0 0.0
    %1632 = vmatprep.subr.mxu0 0.0
    %1633 = vmatpush2.msra.mxu0 0.0
    %1634 = vmatprep.subr.mxu0 0.0
    %1635 = vmatpush2.msra.mxu0 0.0
    %1636 = vmatprep.subr.mxu0 0.0
    %1637 = vmatpush2.msra.mxu0 0.0
    %1638 = vmatprep.subr.mxu0 0.0
    %1639 = vmatpush2.msra.mxu0 0.0
    %1640 = vmatprep.subr.mxu0 0.0
    %1641 = vmatpush2.msra.mxu0 0.0
    %1642 = vmatprep.subr.mxu0 0.0
    %1643 = vmatpush2.msra.mxu0 0.0
    %1644 = vmatprep.subr.mxu0 0.0
    %1645 = vmatpush2.msra.mxu0 0.0
    %1646 = vmatprep.subr.mxu0 0.0
    %1647 = vmatpush2.msra.mxu0 0.0
    %1648 = vmatprep.subr.mxu0 0.0
    %1649 = vmatpush2.msra.mxu0 0.0
    %1650 = vmatprep.subr.mxu0 0.0
    %1651 = vmatpush2.msra.mxu0 0.0
    %1652 = vmatprep.mubr.f32.mxu0 0.0
    %1653 = vmatmul.mubr.f32.gmra.mxu0 %v1541
    %v1654 = vpop.f32.mrf.mxu0
    %v1655 = vadd.f32 0.0, %v1654
    %v1656 = vpop.f32.mrf.mxu0
    %1657 = vmatprep.mubr.f32.mxu0 0.0
    %1658 = vmatmul.mubr.f32.gmra.mxu0 %v1544
    %v1659 = vpop.f32.mrf.mxu0
    %v1660 = vadd.f32 0.0, %v1659
    %v1661 = vpop.f32.mrf.mxu0
    %1662 = vmatprep.mubr.f32.mxu0 0.0
    %1663 = vmatmul.mubr.f32.gmra.mxu0 %v1547
    %v1664 = vpop.f32.mrf.mxu0
    %v1665 = vadd.f32 0.0, %v1664
    %v1666 = vpop.f32.mrf.mxu0
    %1667 = vmatprep.mubr.f32.mxu0 0.0
    %1668 = vmatmul.mubr.f32.gmra.mxu0 %v1550
    %v1669 = vpop.f32.mrf.mxu0
    %v1670 = vadd.f32 0.0, %v1669
    %v1671 = vpop.f32.mrf.mxu0
    %1672 = vmatprep.mubr.f32.mxu0 0.0
    %1673 = vmatmul.mubr.f32.gmra.mxu0 %v1553
    %v1674 = vpop.f32.mrf.mxu0
    %v1675 = vadd.f32 0.0, %v1674
    %v1676 = vpop.f32.mrf.mxu0
    %1677 = vmatprep.mubr.f32.mxu0 0.0
    %1678 = vmatmul.mubr.f32.gmra.mxu0 %v1556
    %v1679 = vpop.f32.mrf.mxu0
    %v1680 = vadd.f32 0.0, %v1679
    %v1681 = vpop.f32.mrf.mxu0
    %1682 = vmatprep.mubr.f32.mxu0 0.0
    %1683 = vmatmul.mubr.f32.gmra.mxu0 %v1559
    %v1684 = vpop.f32.mrf.mxu0
    %v1685 = vadd.f32 0.0, %v1684
    %v1686 = vpop.f32.mrf.mxu0
    %1687 = vmatprep.mubr.f32.mxu0 0.0
    %1688 = vmatmul.mubr.f32.gmra.mxu0 %v1562
    %v1689 = vpop.f32.mrf.mxu0
    %v1690 = vadd.f32 0.0, %v1689
    %v1691 = vpop.f32.mrf.mxu0
    %1692 = vmatprep.mubr.f32.mxu0 0.0
    %1693 = vmatmul.mubr.f32.gmra.mxu0 %v1565
    %v1694 = vpop.f32.mrf.mxu0
    %v1695 = vadd.f32 0.0, %v1694
    %v1696 = vpop.f32.mrf.mxu0
    %1697 = vmatprep.mubr.f32.mxu0 0.0
    %1698 = vmatmul.mubr.f32.gmra.mxu0 %v1568
    %v1699 = vpop.f32.mrf.mxu0
    %v1700 = vadd.f32 0.0, %v1699
    %v1701 = vpop.f32.mrf.mxu0
    %1702 = vmatprep.mubr.f32.mxu0 0.0
    %1703 = vmatmul.mubr.f32.gmra.mxu0 %v1571
    %v1704 = vpop.f32.mrf.mxu0
    %v1705 = vadd.f32 0.0, %v1704
    %v1706 = vpop.f32.mrf.mxu0
    %1707 = vmatprep.mubr.f32.mxu0 0.0
    %1708 = vmatmul.mubr.f32.gmra.mxu0 %v1574
    %v1709 = vpop.f32.mrf.mxu0
    %v1710 = vadd.f32 0.0, %v1709
    %v1711 = vpop.f32.mrf.mxu0
    %1712 = vmatprep.mubr.f32.mxu0 0.0
    %1713 = vmatmul.mubr.f32.gmra.mxu0 %v1577
    %v1714 = vpop.f32.mrf.mxu0
    %v1715 = vadd.f32 0.0, %v1714
    %v1716 = vpop.f32.mrf.mxu0
    %1717 = vmatprep.mubr.f32.mxu0 0.0
    %1718 = vmatmul.mubr.f32.gmra.mxu0 %v1580
    %v1719 = vpop.f32.mrf.mxu0
    %v1720 = vadd.f32 0.0, %v1719
    %v1721 = vpop.f32.mrf.mxu0
    %1722 = vmatprep.mubr.f32.mxu0 0.0
    %1723 = vmatmul.mubr.f32.gmra.mxu0 %v1583
    %v1724 = vpop.f32.mrf.mxu0
    %v1725 = vadd.f32 0.0, %v1724
    %v1726 = vpop.f32.mrf.mxu0
    %1727 = vmatprep.mubr.f32.mxu0 0.0
    %1728 = vmatmul.mubr.f32.gmra.mxu0 %v1586
    %v1729 = vpop.f32.mrf.mxu0
    %v1730 = vadd.f32 0.0, %v1729
    %v1731 = vpop.f32.mrf.mxu0
    %1732 = vdwg.mxu0
    %1741 = vrot.lane.b32.xlu0 %v1695, 96
    %v1742 = vpop.permute.xlu0 %1741
    %1743 = vrot.lane.b32.xlu0 %v1700, 96
    %v1744 = vpop.permute.xlu0 %1743
    %1745 = vrot.lane.b32.xlu0 %v1705, 96
    %v1746 = vpop.permute.xlu0 %1745
    %1747 = vrot.lane.b32.xlu0 %v1710, 96
    %v1748 = vpop.permute.xlu0 %1747
    %1749 = vrot.lane.b32.xlu0 %v1715, 96
    %v1750 = vpop.permute.xlu0 %1749
    %1751 = vrot.lane.b32.xlu0 %v1720, 96
    %v1752 = vpop.permute.xlu0 %1751
    %1753 = vrot.lane.b32.xlu0 %v1725, 96
    %v1754 = vpop.permute.xlu0 %1753
    %1755 = vrot.lane.b32.xlu0 %v1730, 96
    %v1756 = vpop.permute.xlu0 %1755
    %v1765 = vadd.f32 %v1655, %v1742
    %v1766 = vadd.f32 %v1660, %v1744
    %v1767 = vadd.f32 %v1665, %v1746
    %v1768 = vadd.f32 %v1670, %v1748
    %v1769 = vadd.f32 %v1675, %v1750
    %v1770 = vadd.f32 %v1680, %v1752
    %v1771 = vadd.f32 %v1685, %v1754
    %v1772 = vadd.f32 %v1690, %v1756
    %1781 = vrot.lane.b32.xlu0 %v506, 96
    %v1782 = vpop.permute.xlu0 %1781
    %1783 = vrot.lane.b32.xlu0 %v511, 96
    %v1784 = vpop.permute.xlu0 %1783
    %1785 = vrot.lane.b32.xlu0 %v516, 96
    %v1786 = vpop.permute.xlu0 %1785
    %1787 = vrot.lane.b32.xlu0 %v521, 96
    %v1788 = vpop.permute.xlu0 %1787
    %1789 = vrot.lane.b32.xlu0 %v526, 96
    %v1790 = vpop.permute.xlu0 %1789
    %1791 = vrot.lane.b32.xlu0 %v531, 96
    %v1792 = vpop.permute.xlu0 %1791
    %1793 = vrot.lane.b32.xlu0 %v536, 96
    %v1794 = vpop.permute.xlu0 %1793
    %1795 = vrot.lane.b32.xlu0 %v541, 96
    %v1796 = vpop.permute.xlu0 %1795
    %v1805 = vadd.f32 %v1765, %v1782
    %v1806 = vadd.f32 %v1766, %v1784
    %v1807 = vadd.f32 %v1767, %v1786
    %v1808 = vadd.f32 %v1768, %v1788
    %v1809 = vadd.f32 %v1769, %v1790
    %v1810 = vadd.f32 %v1770, %v1792
    %v1811 = vadd.f32 %v1771, %v1794
    %v1812 = vadd.f32 %v1772, %v1796
    %1821 = vrot.lane.b32.xlu0 %v1655, 96
    %v1822 = vpop.permute.xlu0 %1821
    %1823 = vrot.lane.b32.xlu0 %v1660, 96
    %v1824 = vpop.permute.xlu0 %1823
    %1825 = vrot.lane.b32.xlu0 %v1665, 96
    %v1826 = vpop.permute.xlu0 %1825
    %1827 = vrot.lane.b32.xlu0 %v1670, 96
    %v1828 = vpop.permute.xlu0 %1827
    %1829 = vrot.lane.b32.xlu0 %v1675, 96
    %v1830 = vpop.permute.xlu0 %1829
    %1831 = vrot.lane.b32.xlu0 %v1680, 96
    %v1832 = vpop.permute.xlu0 %1831
    %1833 = vrot.lane.b32.xlu0 %v1685, 96
    %v1834 = vpop.permute.xlu0 %1833
    %1835 = vrot.lane.b32.xlu0 %v1690, 96
    %v1836 = vpop.permute.xlu0 %1835
    %v1845 = vadd.f32 %v1695, %v1822
    %v1846 = vadd.f32 %v1700, %v1824
    %v1847 = vadd.f32 %v1705, %v1826
    %v1848 = vadd.f32 %v1710, %v1828
    %v1849 = vadd.f32 %v1715, %v1830
    %v1850 = vadd.f32 %v1720, %v1832
    %v1851 = vadd.f32 %v1725, %v1834
    %v1852 = vadd.f32 %v1730, %v1836
    %v1853 = vadd.f32 %v1845, %v1782
    %v1854 = vadd.f32 %v1846, %v1784
    %v1855 = vadd.f32 %v1847, %v1786
    %v1856 = vadd.f32 %v1848, %v1788
    %v1857 = vadd.f32 %v1849, %v1790
    %v1858 = vadd.f32 %v1850, %v1792
    %v1859 = vadd.f32 %v1851, %v1794
    %v1860 = vadd.f32 %v1852, %v1796
    %v1861 = vtanh.pop %v1805
    %v1862 = vtanh.pop %v1806
    %v1863 = vtanh.pop %v1807
    %v1864 = vtanh.pop %v1808
    %v1865 = vtanh.pop %v1809
    %v1866 = vtanh.pop %v1810
    %v1867 = vtanh.pop %v1811
    %v1868 = vtanh.pop %v1812
    %v1869 = vtanh.pop %v1853
    %v1870 = vtanh.pop %v1854
    %v1871 = vtanh.pop %v1855
    %v1872 = vtanh.pop %v1856
    %v1873 = vtanh.pop %v1857
    %v1874 = vtanh.pop %v1858
    %v1875 = vtanh.pop %v1859
    %v1876 = vtanh.pop %v1860
    %v1877 = vlaneseq
    %v1878 = vshrl.u32 %v1877, 7
    %v1879 = vsub.s32 0, %v1878
    %v1880 = vrot.slane %v1394, %v1879
    %v1882 = vsel %vm119, %v1861, 0
    %v1885 = vsel %vm119, %v1862, 0
    %v1888 = vsel %vm119, %v1863, 0
    %v1891 = vsel %vm119, %v1864, 0
    %v1894 = vsel %vm119, %v1865, 0
    %v1897 = vsel %vm119, %v1866, 0
    %v1900 = vsel %vm119, %v1867, 0
    %v1903 = vsel %vm119, %v1868, 0
    %v1906 = vsel %vm119, %v1869, 0
    %v1909 = vsel %vm119, %v1870, 0
    %v1912 = vsel %vm119, %v1871, 0
    %v1915 = vsel %vm119, %v1872, 0
    %v1918 = vsel %vm119, %v1873, 0
    %v1921 = vsel %vm119, %v1874, 0
    %v1924 = vsel %vm119, %v1875, 0
    %v1927 = vsel %vm119, %v1876, 0
    %1929 = vmatprep.subr.mxu0 0.0
    %1930 = vmatpush1.msra.mxu0 0.0
    %1931 = vmatprep.subr.mxu0 0.0
    %1932 = vmatpush1.msra.mxu0 0.0
    %1933 = vmatprep.subr.mxu0 0.0
    %1934 = vmatpush1.msra.mxu0 0.0
    %1935 = vmatprep.subr.mxu0 0.0
    %1936 = vmatpush1.msra.mxu0 0.0
    %1937 = vmatprep.subr.mxu0 0.0
    %1938 = vmatpush1.msra.mxu0 0.0
    %1939 = vmatprep.subr.mxu0 0.0
    %1940 = vmatpush1.msra.mxu0 0.0
    %1941 = vmatprep.subr.mxu0 0.0
    %1942 = vmatpush1.msra.mxu0 0.0
    %1943 = vmatprep.subr.mxu0 0.0
    %1944 = vmatpush1.msra.mxu0 0.0
    %1945 = vmatprep.subr.mxu0 0.0
    %1946 = vmatpush1.msra.mxu0 0.0
    %1947 = vmatprep.subr.mxu0 0.0
    %1948 = vmatpush1.msra.mxu0 0.0
    %1949 = vmatprep.subr.mxu0 0.0
    %1950 = vmatpush1.msra.mxu0 0.0
    %1951 = vmatprep.subr.mxu0 0.0
    %1952 = vmatpush1.msra.mxu0 0.0
    %1953 = vmatprep.subr.mxu0 0.0
    %1954 = vmatpush1.msra.mxu0 %v1393
    %1955 = vmatprep.subr.mxu0 0.0
    %1956 = vmatpush1.msra.mxu0 %v1392
    %1957 = vmatprep.subr.mxu0 0.0
    %1958 = vmatpush1.msra.mxu0 %v1391
    %1959 = vmatprep.subr.mxu0 0.0
    %1960 = vmatpush1.msra.mxu0 %v1390
    %1961 = vmatprep.subr.mxu0 0.0
    %1962 = vmatpush2.msra.mxu0 0.0
    %1963 = vmatprep.subr.mxu0 0.0
    %1964 = vmatpush2.msra.mxu0 0.0
    %1965 = vmatprep.subr.mxu0 0.0
    %1966 = vmatpush2.msra.mxu0 0.0
    %1967 = vmatprep.subr.mxu0 0.0
    %1968 = vmatpush2.msra.mxu0 0.0
    %1969 = vmatprep.subr.mxu0 0.0
    %1970 = vmatpush2.msra.mxu0 0.0
    %1971 = vmatprep.subr.mxu0 0.0
    %1972 = vmatpush2.msra.mxu0 0.0
    %1973 = vmatprep.subr.mxu0 0.0
    %1974 = vmatpush2.msra.mxu0 0.0
    %1975 = vmatprep.subr.mxu0 0.0
    %1976 = vmatpush2.msra.mxu0 0.0
    %1977 = vmatprep.subr.mxu0 0.0
    %1978 = vmatpush2.msra.mxu0 0.0
    %1979 = vmatprep.subr.mxu0 0.0
    %1980 = vmatpush2.msra.mxu0 0.0
    %1981 = vmatprep.subr.mxu0 0.0
    %1982 = vmatpush2.msra.mxu0 0.0
    %1983 = vmatprep.subr.mxu0 0.0
    %1984 = vmatpush2.msra.mxu0 0.0
    %1985 = vmatprep.subr.mxu0 0.0
    %1986 = vmatpush2.msra.mxu0 0.0
    %1987 = vmatprep.subr.mxu0 0.0
    %1988 = vmatpush2.msra.mxu0 0.0
    %1989 = vmatprep.subr.mxu0 0.0
    %1990 = vmatpush2.msra.mxu0 0.0
    %1991 = vmatprep.subr.mxu0 0.0
    %1992 = vmatpush2.msra.mxu0 0.0
    %1993 = vmatprep.mubr.f32.mxu0 0.0
    %1994 = vmatmul.mubr.f32.gmra.mxu0 %v1882
    %v1995 = vpop.f32.mrf.mxu0
    %v1996 = vadd.f32 %v1880, %v1995
    %v1997 = vpop.f32.mrf.mxu0
    %1998 = vmatprep.mubr.f32.mxu0 0.0
    %1999 = vmatmul.mubr.f32.gmra.mxu0 %v1885
    %v2000 = vpop.f32.mrf.mxu0
    %v2001 = vadd.f32 %v1880, %v2000
    %v2002 = vpop.f32.mrf.mxu0
    %2003 = vmatprep.mubr.f32.mxu0 0.0
    %2004 = vmatmul.mubr.f32.gmra.mxu0 %v1888
    %v2005 = vpop.f32.mrf.mxu0
    %v2006 = vadd.f32 %v1880, %v2005
    %v2007 = vpop.f32.mrf.mxu0
    %2008 = vmatprep.mubr.f32.mxu0 0.0
    %2009 = vmatmul.mubr.f32.gmra.mxu0 %v1891
    %v2010 = vpop.f32.mrf.mxu0
    %v2011 = vadd.f32 %v1880, %v2010
    %v2012 = vpop.f32.mrf.mxu0
    %2013 = vmatprep.mubr.f32.mxu0 0.0
    %2014 = vmatmul.mubr.f32.gmra.mxu0 %v1894
    %v2015 = vpop.f32.mrf.mxu0
    %v2016 = vadd.f32 %v1880, %v2015
    %v2017 = vpop.f32.mrf.mxu0
    %2018 = vmatprep.mubr.f32.mxu0 0.0
    %2019 = vmatmul.mubr.f32.gmra.mxu0 %v1897
    %v2020 = vpop.f32.mrf.mxu0
    %v2021 = vadd.f32 %v1880, %v2020
    %v2022 = vpop.f32.mrf.mxu0
    %2023 = vmatprep.mubr.f32.mxu0 0.0
    %2024 = vmatmul.mubr.f32.gmra.mxu0 %v1900
    %v2025 = vpop.f32.mrf.mxu0
    %v2026 = vadd.f32 %v1880, %v2025
    %v2027 = vpop.f32.mrf.mxu0
    %2028 = vmatprep.mubr.f32.mxu0 0.0
    %2029 = vmatmul.mubr.f32.gmra.mxu0 %v1903
    %v2030 = vpop.f32.mrf.mxu0
    %v2031 = vadd.f32 %v1880, %v2030
    %v2032 = vpop.f32.mrf.mxu0
    %2033 = vmatprep.mubr.f32.mxu0 0.0
    %2034 = vmatmul.mubr.f32.gmra.mxu0 %v1906
    %v2035 = vpop.f32.mrf.mxu0
    %v2036 = vadd.f32 %v1880, %v2035
    %v2037 = vpop.f32.mrf.mxu0
    %2038 = vmatprep.mubr.f32.mxu0 0.0
    %2039 = vmatmul.mubr.f32.gmra.mxu0 %v1909
    %v2040 = vpop.f32.mrf.mxu0
    %v2041 = vadd.f32 %v1880, %v2040
    %v2042 = vpop.f32.mrf.mxu0
    %2043 = vmatprep.mubr.f32.mxu0 0.0
    %2044 = vmatmul.mubr.f32.gmra.mxu0 %v1912
    %v2045 = vpop.f32.mrf.mxu0
    %v2046 = vadd.f32 %v1880, %v2045
    %v2047 = vpop.f32.mrf.mxu0
    %2048 = vmatprep.mubr.f32.mxu0 0.0
    %2049 = vmatmul.mubr.f32.gmra.mxu0 %v1915
    %v2050 = vpop.f32.mrf.mxu0
    %v2051 = vadd.f32 %v1880, %v2050
    %v2052 = vpop.f32.mrf.mxu0
    %2053 = vmatprep.mubr.f32.mxu0 0.0
    %2054 = vmatmul.mubr.f32.gmra.mxu0 %v1918
    %v2055 = vpop.f32.mrf.mxu0
    %v2056 = vadd.f32 %v1880, %v2055
    %v2057 = vpop.f32.mrf.mxu0
    %2058 = vmatprep.mubr.f32.mxu0 0.0
    %2059 = vmatmul.mubr.f32.gmra.mxu0 %v1921
    %v2060 = vpop.f32.mrf.mxu0
    %v2061 = vadd.f32 %v1880, %v2060
    %v2062 = vpop.f32.mrf.mxu0
    %2063 = vmatprep.mubr.f32.mxu0 0.0
    %2064 = vmatmul.mubr.f32.gmra.mxu0 %v1924
    %v2065 = vpop.f32.mrf.mxu0
    %v2066 = vadd.f32 %v1880, %v2065
    %v2067 = vpop.f32.mrf.mxu0
    %2068 = vmatprep.mubr.f32.mxu0 0.0
    %2069 = vmatmul.mubr.f32.gmra.mxu0 %v1927
    %v2070 = vpop.f32.mrf.mxu0
    %v2071 = vadd.f32 %v1880, %v2070
    %v2072 = vpop.f32.mrf.mxu0
    %2073 = vdwg.mxu0
    %v2074 = vtanh.pop %v1996
    %v2075 = vtanh.pop %v2001
    %v2076 = vtanh.pop %v2006
    %v2077 = vtanh.pop %v2011
    %v2078 = vtanh.pop %v2016
    %v2079 = vtanh.pop %v2021
    %v2080 = vtanh.pop %v2026
    %v2081 = vtanh.pop %v2031
    %v2082 = vtanh.pop %v2036
    %v2083 = vtanh.pop %v2041
    %v2084 = vtanh.pop %v2046
    %v2085 = vtanh.pop %v2051
    %v2086 = vtanh.pop %v2056
    %v2087 = vtanh.pop %v2061
    %v2088 = vtanh.pop %v2066
    %v2089 = vtanh.pop %v2071
    %v2090 = vadd.f32 %v2074, %v2082
    %v2091 = vadd.f32 %v2075, %v2083
    %v2092 = vadd.f32 %v2076, %v2084
    %v2093 = vadd.f32 %v2077, %v2085
    %v2094 = vadd.f32 %v2078, %v2086
    %v2095 = vadd.f32 %v2079, %v2087
    %v2096 = vadd.f32 %v2080, %v2088
    %v2097 = vadd.f32 %v2081, %v2089
    %v2098 = vmul.f32 %v2090, 0.5
    %v2099 = vmul.f32 %v2091, 0.5
    %v2100 = vmul.f32 %v2092, 0.5
    %v2101 = vmul.f32 %v2093, 0.5
    %v2102 = vmul.f32 %v2094, 0.5
    %v2103 = vmul.f32 %v2095, 0.5
    %v2104 = vmul.f32 %v2096, 0.5
    %v2105 = vmul.f32 %v2097, 0.5
    %2106 = vmatprep.subr.mxu0 0.0
    %2107 = vmatpush1.msra.mxu0 0.0
    %2108 = vmatprep.subr.mxu0 0.0
    %2109 = vmatpush1.msra.mxu0 0.0
    %2110 = vmatprep.subr.mxu0 0.0
    %2111 = vmatpush1.msra.mxu0 0.0
    %2112 = vmatprep.subr.mxu0 0.0
    %2113 = vmatpush1.msra.mxu0 0.0
    %2114 = vmatprep.subr.mxu0 0.0
    %2115 = vmatpush1.msra.mxu0 0.0
    %2116 = vmatprep.subr.mxu0 0.0
    %2117 = vmatpush1.msra.mxu0 0.0
    %2118 = vmatprep.subr.mxu0 0.0
    %2119 = vmatpush1.msra.mxu0 0.0
    %2120 = vmatprep.subr.mxu0 0.0
    %2121 = vmatpush1.msra.mxu0 0.0
    %2122 = vmatprep.subr.mxu0 0.0
    %2123 = vmatpush1.msra.mxu0 %v2105
    %2124 = vmatprep.subr.mxu0 0.0
    %2125 = vmatpush1.msra.mxu0 %v2104
    %2126 = vmatprep.subr.mxu0 0.0
    %2127 = vmatpush1.msra.mxu0 %v2103
    %2128 = vmatprep.subr.mxu0 0.0
    %2129 = vmatpush1.msra.mxu0 %v2102
    %2130 = vmatprep.subr.mxu0 0.0
    %2131 = vmatpush1.msra.mxu0 %v2101
    %2132 = vmatprep.subr.mxu0 0.0
    %2133 = vmatpush1.msra.mxu0 %v2100
    %2134 = vmatprep.subr.mxu0 0.0
    %2135 = vmatpush1.msra.mxu0 %v2099
    %2136 = vmatprep.subr.mxu0 0.0
    %2137 = vmatpush1.msra.mxu0 %v2098
    %2138 = vmatprep.subr.mxu0 0.0
    %2139 = vmatpush2.msra.mxu0 0.0
    %2140 = vmatprep.subr.mxu0 0.0
    %2141 = vmatpush2.msra.mxu0 0.0
    %2142 = vmatprep.subr.mxu0 0.0
    %2143 = vmatpush2.msra.mxu0 0.0
    %2144 = vmatprep.subr.mxu0 0.0
    %2145 = vmatpush2.msra.mxu0 0.0
    %2146 = vmatprep.subr.mxu0 0.0
    %2147 = vmatpush2.msra.mxu0 0.0
    %2148 = vmatprep.subr.mxu0 0.0
    %2149 = vmatpush2.msra.mxu0 0.0
    %2150 = vmatprep.subr.mxu0 0.0
    %2151 = vmatpush2.msra.mxu0 0.0
    %2152 = vmatprep.subr.mxu0 0.0
    %2153 = vmatpush2.msra.mxu0 0.0
    %2154 = vmatprep.subr.mxu0 0.0
    %2155 = vmatpush2.msra.mxu0 0.0
    %2156 = vmatprep.subr.mxu0 0.0
    %2157 = vmatpush2.msra.mxu0 0.0
    %2158 = vmatprep.subr.mxu0 0.0
    %2159 = vmatpush2.msra.mxu0 0.0
    %2160 = vmatprep.subr.mxu0 0.0
    %2161 = vmatpush2.msra.mxu0 0.0
    %2162 = vmatprep.subr.mxu0 0.0
    %2163 = vmatpush2.msra.mxu0 0.0
    %2164 = vmatprep.subr.mxu0 0.0
    %2165 = vmatpush2.msra.mxu0 0.0
    %2166 = vmatprep.subr.mxu0 0.0
    %2167 = vmatpush2.msra.mxu0 0.0
    %2168 = vmatprep.subr.mxu0 0.0
    %2169 = vmatpush2.msra.mxu0 0.0
    %2170 = vmatprep.mubr.f32.mxu0 0.0
    %2171 = vmatmul.mubr.f32.gmra.mxu0 %v1282
    %v2172 = vpop.f32.mrf.mxu0
    %v2173 = vadd.f32 0.0, %v2172
    %v2174 = vpop.f32.mrf.mxu0
    %2175 = vmatprep.mubr.f32.mxu0 0.0
    %2176 = vmatmul.mubr.f32.gmra.mxu0 %v1285
    %v2177 = vpop.f32.mrf.mxu0
    %v2178 = vadd.f32 0.0, %v2177
    %v2179 = vpop.f32.mrf.mxu0
    %2180 = vmatprep.mubr.f32.mxu0 0.0
    %2181 = vmatmul.mubr.f32.gmra.mxu0 %v1288
    %v2182 = vpop.f32.mrf.mxu0
    %v2183 = vadd.f32 0.0, %v2182
    %v2184 = vpop.f32.mrf.mxu0
    %2185 = vmatprep.mubr.f32.mxu0 0.0
    %2186 = vmatmul.mubr.f32.gmra.mxu0 %v1291
    %v2187 = vpop.f32.mrf.mxu0
    %v2188 = vadd.f32 0.0, %v2187
    %v2189 = vpop.f32.mrf.mxu0
    %2190 = vdwg.mxu0
    %v2191 = vmul.f32 %v2173, %v389
    %v2192 = vmul.f32 %v2178, %v391
    %v2193 = vmul.f32 %v2183, %v393
    %v2194 = vmul.f32 %v2188, %v395
    %v2195 = vadd.f32 %v1382, %v2191
    %v2196 = vadd.f32 %v1383, %v2192
    %v2197 = vadd.f32 %v1384, %v2193
    %v2198 = vadd.f32 %v1385, %v2194
    %v2199 = vsel %vm119, %v2098, 0.0
    %v2200 = vsel %vm119, %v2099, 0.0
    %v2201 = vadd.f32 %v2199, %v2200
    %v2202 = vsel %vm119, %v2100, 0.0
    %v2203 = vadd.f32 %v2201, %v2202
    %v2204 = vsel %vm119, %v2101, 0.0
    %v2205 = vadd.f32 %v2203, %v2204
    %v2206 = vrot.slane %v2205, 4
    %v2207 = vadd.f32 %v2205, %v2206
    %v2208 = vrot.slane %v2207, 2
    %v2209 = vadd.f32 %v2207, %v2208
    %v2210 = vrot.slane %v2209, 1
    %v2211 = vadd.f32 %v2209, %v2210
    %v2212 = vsel %vm119, %v2102, 0.0
    %v2213 = vsel %vm119, %v2103, 0.0
    %v2214 = vadd.f32 %v2212, %v2213
    %v2215 = vsel %vm119, %v2104, 0.0
    %v2216 = vadd.f32 %v2214, %v2215
    %v2217 = vsel %vm119, %v2105, 0.0
    %v2218 = vadd.f32 %v2216, %v2217
    %v2219 = vrot.slane %v2218, 4
    %v2220 = vadd.f32 %v2218, %v2219
    %v2221 = vrot.slane %v2220, 2
    %v2222 = vadd.f32 %v2220, %v2221
    %v2223 = vrot.slane %v2222, 1
    %v2224 = vadd.f32 %v2222, %v2223
    %vm2225 = vcmask 1040384
    %v2226 = vsel %vm2225, %v2211, %v2224
    %v2227 = vmul.f32 %v2226, 0.03125
    %v2228 = vsel %vm119, %v2195, 0.0
    %v2229 = vsel %vm119, %v2196, 0.0
    %v2230 = vadd.f32 %v2228, %v2229
    %v2231 = vrot.slane %v2230, 4
    %v2232 = vadd.f32 %v2230, %v2231
    %v2233 = vrot.slane %v2232, 2
    %v2234 = vadd.f32 %v2232, %v2233
    %v2235 = vrot.slane %v2234, 1
    %v2236 = vadd.f32 %v2234, %v2235
    %v2237 = vsel %vm119, %v2197, 0.0
    %v2238 = vsel %vm119, %v2198, 0.0
    %v2239 = vadd.f32 %v2237, %v2238
    %v2240 = vrot.slane %v2239, 4
    %v2241 = vadd.f32 %v2239, %v2240
    %v2242 = vrot.slane %v2241, 2
    %v2243 = vadd.f32 %v2241, %v2242
    %v2244 = vrot.slane %v2243, 1
    %v2245 = vadd.f32 %v2243, %v2244
    %v2246 = vsel %vm2225, %v2236, %v2245
    %v2247 = vmul.f32 %v2246, 0.0625
    %2248 = vst.msk [vmem:[#allocation2] sm:$0xff] %vm119, %v2098
    %2249 = vst.msk [vmem:[#allocation2 + $0x8] sm:$0xff] %vm119, %v2099
    %2250 = vst.msk [vmem:[#allocation2 + $0x10] sm:$0xff] %vm119, %v2100
    %2251 = vst.msk [vmem:[#allocation2 + $0x18] sm:$0xff] %vm119, %v2101
    %2252 = vst.msk [vmem:[#allocation2 + $0x20] sm:$0xff] %vm119, %v2102
    %2253 = vst.msk [vmem:[#allocation2 + $0x28] sm:$0xff] %vm119, %v2103
    %2254 = vst.msk [vmem:[#allocation2 + $0x30] sm:$0xff] %vm119, %v2104
    %2255 = vst.msk [vmem:[#allocation2 + $0x38] sm:$0xff] %vm119, %v2105
    %vm2256 = vcmask 254976
    %2257 = vst.msk [vmem:[#allocation4] sm:$0x3] %vm2256, %v193
    %2259 = vrot.lane.b32.xlu0 %v2247, 32
    %v2260 = vpop.permute.xlu0 %2259
    %vm2262 = vcmask 517376
    %2263 = vst.msk [vmem:[#allocation4] sm:$0x3] %vm2262, %v2260
    %2265 = vrot.lane.b32.xlu0 %v2227, 64
    %v2266 = vpop.permute.xlu0 %2265
    %vm2268 = vcmask 779776
    %2269 = vst.msk [vmem:[#allocation4] sm:$0x3] %vm2268, %v2266
    %v2270 = vld [vmem:[%s5] sm:$0x3]
    %2272 = vrot.lane.b32.xlu0 %v2270, 96
    %v2273 = vpop.permute.xlu0 %2272
    %vm2275 = vcmask 1042176
    %2276 = vst.msk [vmem:[#allocation4] sm:$0x3] %vm2275, %v2273
    // Predicated region
    $region26: #{_sgnn_forward_impl.1} parent=1 // pred_check
      _
    $region27: #{_sgnn_forward_impl.1} parent=1 // pred_check_branch
      %2278 = sbr.rel (0) target = $region29
    $region28: #{_sgnn_forward_impl.1} parent=1 // pred_region
      %s2280 = ssub.s32 1024, 1024
      %2281 = vsyncadd [#allocation3], %s2280
      %s2282 = sshll.u32 [#allocation2], 4
      %s2283 = int_to_ptr.vmem [resolvable:$true] %s2282
      %2288 = dma.vmem_to_hbm [thread:$0]  %s2283, 1024, %s6, [#allocation3], 128, 128, 8
    $region29: #{_sgnn_forward_impl.1} parent=1 // pred_fallthru
      _
    // Predicated region
    $region30: #{_sgnn_forward_impl.1} parent=1 // pred_check
      _
    $region31: #{_sgnn_forward_impl.1} parent=1 // pred_check_branch
      %2290 = sbr.rel (0) target = $region33
    $region32: #{_sgnn_forward_impl.1} parent=1 // pred_region
      %s2292 = ssub.s32 32, 32
      %2293 = vsyncadd [#allocation5], %s2292
      %s2295 = sshll.u32 [#allocation4], 4
      %s2296 = int_to_ptr.vmem [resolvable:$true] %s2295
      %2298 = dma.vmem_to_hbm [thread:$0]  %s2296, 32, %s7, [#allocation5]
    $region33: #{_sgnn_forward_impl.1} parent=1 // pred_fallthru
      _
    // Predicated region
    $region34: #{_sgnn_forward_impl.1} parent=1 // pred_check
      _
    $region35: #{_sgnn_forward_impl.1} parent=1 // pred_check_branch
      %2300 = sbr.rel (0) target = $region37
    $region36: #{_sgnn_forward_impl.1} parent=1 // pred_region
      %2301 = dma.done [#allocation3], 1024
    $region37: #{_sgnn_forward_impl.1} parent=1 // pred_fallthru
      _
    // Predicated region
    $region38: #{_sgnn_forward_impl.1} parent=1 // pred_check
      _
    $region39: #{_sgnn_forward_impl.1} parent=1 // pred_check_branch
      %2303 = sbr.rel (0) target = $region41
    $region40: #{_sgnn_forward_impl.1} parent=1 // pred_region
      %2304 = dma.done [#allocation5], 32
    $region41: #{_sgnn_forward_impl.1} parent=1 // pred_fallthru
      _
    %2305 = vsyncpa [#allocation3], 1
    %2306 = vsyncpa [#allocation5], 1

</llo_original>
